<compile_context>
chip_gen: v6e
topology: v6e:2x2x1
jax: 0.10.0
libtpu: 0.0.40
codegen_flags: <defaults>
</compile_context>

<pallas_src>
import functools

import jax
import jax.numpy as jnp
from jax.experimental import pallas as pl
from jax.experimental.pallas import tpu as pltpu

_BN_EPS = 1e-5
_LANE = 128
_SUBLANE = 8


def _round_up(x, m):
    return ((x + m - 1) // m) * m


def _pad2(a, rows, cols):
    pr, pc = rows - a.shape[0], cols - a.shape[1]
    if pr == 0 and pc == 0:
        return a
    return jnp.pad(a, ((0, pr), (0, pc)))


def _vmem_limit_bytes():
    """Generation-aware scoped-VMEM limit: ~75% of physical VMEM (~48 MiB v7x, ~96 MiB v5e/v6e)."""
    cap = None
    try:
        cap = int(getattr(pltpu.get_tpu_info(), "vmem_capacity_bytes"))
    except Exception:
        cap = None
    if cap is None:
        kind = ""
        try:
            kind = jax.devices()[0].device_kind.lower()
        except Exception:
            pass
        cap = (64 << 20) if "v7" in kind else (128 << 20)
    return max(32 << 20, (cap * 3) // 4)


def _plan_tiles(N, Dp, Hp, vmem_limit, md_item, x_item, inter_item,
                block_rows=None, block_h=None):
    """Pick (pass1 row tile, pass2 row tile, hidden block, padded H, padded N, #hidden blocks)."""
    budget = int(vmem_limit * 0.9)

    # --- hidden (fc1-out / fc2-contraction) blocking; both weight blocks are double-buffered ---
    if block_h is None:
        if 4 * Dp * Hp * md_item <= budget // 2:
            block_h = Hp
        else:
            block_h = ((budget // 2) // (4 * Dp * md_item)) // _LANE * _LANE
            block_h = min(max(block_h, _LANE), Hp)
    block_h = max(_LANE, _round_up(min(block_h, Hp), _LANE))
    Hp = _round_up(Hp, block_h)
    n_h = Hp // block_h
    w_bytes = 4 * Dp * block_h * md_item  # w1 + w2 blocks, double-buffered by the pipeline

    # --- pass-1 row tile: count double-buffered x / y tiles and in-kernel temporaries ---
    if block_rows is None:
        per_row = (2 * Dp * x_item          # x tile (double-buffered)
                   + 2 * Dp * inter_item    # y tile (double-buffered)
                   + 6 * block_h            # f32 hidden + narrow matmul copy
                   + 16 * Dp)               # f32 y/x temps + f32 accumulator scratch
        tm = max((budget - w_bytes) // per_row, _SUBLANE)
        tm = (tm // 128) * 128 if tm >= 128 else (tm // _SUBLANE) * _SUBLANE
        block_rows = int(min(max(tm, _SUBLANE), 512))
    block_rows = max(_SUBLANE, _round_up(block_rows, _SUBLANE))
    block_rows = min(block_rows, _round_up(N, _SUBLANE))
    if block_rows >= N and N >= 2 * _SUBLANE:
        # keep >= 2 row tiles so the parallel axis can shard across v7x's two TensorCores
        block_rows = _round_up(-(-N // 2), _SUBLANE)

    # --- pass-2 row tile: no resident weights / hidden buffer -> much larger tiles ---
    per_row2 = 2 * Dp * (inter_item + x_item) + 4 * Dp
    tm2_budget = int(max(budget // per_row2, block_rows))
    target2 = min(2048, max(block_rows, _round_up(-(-N // 2), block_rows)))
    block_rows2 = block_rows
    while block_rows2 * 2 <= min(target2, tm2_budget):
        block_rows2 *= 2

    Np = _round_up(N, block_rows2)          # multiple of both row tiles
    return block_rows, block_rows2, block_h, Hp, Np, n_h


def _ffn_stats_kernel(x_ref, w1_ref, b1_ref, w2_ref, b2_ref, y_ref, stats_ref, acc_ref,
                      *, matmul_dtype):
    hb = pl.program_id(1)
    x = x_ref[...]                                                       # (TM, Dp) model dtype
    # fc1 -> relu (MXU, f32 accumulation; weights already pre-cast to matmul_dtype)
    h = jnp.dot(x.astype(matmul_dtype), w1_ref[...], preferred_element_type=jnp.float32)
    h = jnp.maximum(h + b1_ref[...], 0.0)                                # b1 kept f32
    part = jnp.dot(h.astype(matmul_dtype), w2_ref[...], preferred_element_type=jnp.float32)

    @pl.when(hb == 0)
    def _():
        acc_ref[...] = part

    @pl.when(hb > 0)
    def _():
        acc_ref[...] += part

    @pl.when(hb == pl.num_programs(1) - 1)
    def _():
        # dropout == identity (deterministic); bias + residual in f32
        y = acc_ref[...] + b2_ref[...] + x.astype(jnp.float32)
        y_ref[...] = y.astype(y_ref.dtype)
        # single-pass partial BN statistics for this row tile (padded rows corrected in wrapper)
        s1 = jnp.sum(y, axis=0, keepdims=True)                           # (1, Dp)
        s2 = jnp.sum(y * y, axis=0, keepdims=True)                       # (1, Dp)
        pad = jnp.zeros((_SUBLANE - 2, s1.shape[1]), jnp.float32)
        stats_ref[...] = jnp.concatenate([s1, s2, pad], axis=0)          # (8, Dp)


def _bn_apply_kernel(y_ref, scale_ref, shift_ref, o_ref):
    y = y_ref[...].astype(jnp.float32)
    o_ref[...] = (y * scale_ref[...] + shift_ref[...]).astype(o_ref.dtype)


def position_wise_feed_forward(x, w1, b1, w2, b2, gamma, beta,
                               *, block_rows=None, block_h=None, matmul_dtype=jnp.bfloat16):
    """x: (B, S, D); w1: (D, H); b1: (H,); w2: (H, D); b2, gamma, beta: (D,)."""
    B, S, D = x.shape
    H = w1.shape[1]
    N = B * S
    dtype = x.dtype
    md = jnp.dtype(matmul_dtype)
    inter_dtype = dtype                     # pass-1 intermediate stored in the model dtype

    Dp = _round_up(D, _LANE)
    Hp0 = _round_up(H, _LANE)
    vmem_limit = _vmem_limit_bytes()
    x_item = jnp.dtype(dtype).itemsize
    inter_item = jnp.dtype(inter_dtype).itemsize
    block_rows, block_rows2, block_h, Hp, Np, n_h = _plan_tiles(
        N, Dp, Hp0, vmem_limit, md.itemsize, x_item, inter_item,
        block_rows=block_rows, block_h=block_h)
    n_tiles = Np // block_rows
    n_tiles2 = Np // block_rows2

    # zero-pad to lane-dense / tile-aligned shapes; pre-cast weights to the MXU operand dtype once
    x2 = _pad2(x.reshape(N, D), Np, Dp)
    w1p = _pad2(w1, Dp, Hp).astype(md)
    w2p = _pad2(w2, Hp, Dp).astype(md)
    b1p = _pad2(b1.reshape(1, H).astype(jnp.float32), 1, Hp)
    b2p = _pad2(b2.reshape(1, D).astype(jnp.float32), 1, Dp)
    gp = _pad2(gamma.reshape(1, D).astype(jnp.float32), 1, Dp)
    bp = _pad2(beta.reshape(1, D).astype(jnp.float32), 1, Dp)

    params1 = pltpu.CompilerParams(dimension_semantics=("parallel", "arbitrary"),
                                   vmem_limit_bytes=vmem_limit)
    params2 = pltpu.CompilerParams(dimension_semantics=("parallel",),
                                   vmem_limit_bytes=vmem_limit)

    # ---- pass 1: FFN + residual, per-row-tile partial BN statistics ------------------------------
    flops1 = 4 * Np * Dp * Hp + 8 * Np * Dp
    bytes1 = (Np * Dp * (x_item + inter_item) + 2 * Dp * Hp * md.itemsize
              + n_tiles * _SUBLANE * Dp * 4 + (Hp + 2 * Dp) * 4)
    kern1 = functools.partial(_ffn_stats_kernel, matmul_dtype=md)
    y_un, stats_part = pl.pallas_call(
        kern1,
        out_shape=(jax.ShapeDtypeStruct((Np, Dp), inter_dtype),
                   jax.ShapeDtypeStruct((n_tiles * _SUBLANE, Dp), jnp.float32)),
        grid=(n_tiles, n_h),
        in_specs=[
            pl.BlockSpec((block_rows, Dp), lambda i, h: (i, 0)),   # x tile, resident across h
            pl.BlockSpec((Dp, block_h), lambda i, h: (0, h)),      # fc1 weight block (pre-cast)
            pl.BlockSpec((1, block_h), lambda i, h: (0, h)),       # fc1 bias (f32)
            pl.BlockSpec((block_h, Dp), lambda i, h: (h, 0)),      # fc2 weight block (pre-cast)
            pl.BlockSpec((1, Dp), lambda i, h: (0, 0)),            # fc2 bias (f32)
        ],
        out_specs=(
            pl.BlockSpec((block_rows, Dp), lambda i, h: (i, 0)),   # unnormalized y tile
            pl.BlockSpec((_SUBLANE, Dp), lambda i, h: (i, 0)),     # per-tile (sum, sumsq)
        ),
        scratch_shapes=[pltpu.VMEM((block_rows, Dp), jnp.float32)],
        compiler_params=params1,
        cost_estimate=pl.CostEstimate(flops=int(flops1), transcendentals=0,
                                      bytes_accessed=int(bytes1)),
    )(x2, w1p, b1p, w2p, b2p)

    # combine per-tile partial statistics and fold mean/var/rsqrt into scale/shift (tiny XLA ops)
    stats = stats_part.reshape(n_tiles, _SUBLANE, Dp).sum(axis=0)
    s1, s2 = stats[0], stats[1]
    if Np != N:
        # padded rows (x == 0) contribute the constant c = relu(b1) @ w2 + b2; subtract exactly.
        c = (jnp.dot(jax.nn.relu(b1p).astype(md), w2p,
                     preferred_element_type=jnp.float32) + b2p)[0]
        n_pad = float(Np - N)
        s1 = s1 - n_pad * c
        s2 = s2 - n_pad * c * c
    inv_n = 1.0 / float(N)
    mean = s1 * inv_n
    var = jnp.maximum(s2 * inv_n - mean * mean, 0.0)                     # biased variance
    scale = gp[0] * jax.lax.rsqrt(var + _BN_EPS)                         # gamma / sqrt(var+eps)
    shift = bp[0] - mean * scale                                         # beta - mean*scale
    scale = scale.reshape(1, Dp)
    shift = shift.reshape(1, Dp)

    # ---- pass 2: y*scale + shift, larger tiles, normalized in place ------------------------------
    out = pl.pallas_call(
        _bn_apply_kernel,
        out_shape=jax.ShapeDtypeStruct((Np, Dp), dtype),
        grid=(n_tiles2,),
        in_specs=[
            pl.BlockSpec((block_rows2, Dp), lambda j: (j, 0)),     # y tile (pipelined)
            pl.BlockSpec((1, Dp), lambda j: (0, 0)),               # scale, VMEM-resident
            pl.BlockSpec((1, Dp), lambda j: (0, 0)),               # shift, VMEM-resident
        ],
        out_specs=pl.BlockSpec((block_rows2, Dp), lambda j: (j, 0)),
        compiler_params=params2,
        cost_estimate=pl.CostEstimate(flops=int(2 * Np * Dp), transcendentals=0,
                                      bytes_accessed=int(Np * Dp * (inter_item + x_item) + 8 * Dp)),
        input_output_aliases={0: 0},
    )(y_un, scale, shift)

    return out[:N, :D].reshape(B, S, D)


def _reference(x, w1, b1, w2, b2, gamma, beta):
    h = jax.nn.relu(x @ w1 + b1)
    y = h @ w2 + b2 + x
    mean = y.mean(axis=(0, 1), keepdims=True)
    var = ((y - mean) ** 2).mean(axis=(0, 1), keepdims=True)
    return gamma * (y - mean) / jnp.sqrt(var + _BN_EPS) + beta


def _make_inputs(key, B, S, D, H):
    kx, k1, kb1, k2, kb2, kg, kb = jax.random.split(key, 7)
    x = jax.random.normal(kx, (B, S, D), dtype=jnp.float32)
    bound1 = 1.0 / (D ** 0.5)
    w1 = jax.random.uniform(k1, (D, H), jnp.float32, -bound1, bound1)   # torch fc1.weight.T
    b1 = jax.random.uniform(kb1, (H,), jnp.float32, -bound1, bound1)
    bound2 = 1.0 / (H ** 0.5)
    w2 = jax.random.uniform(k2, (H, D), jnp.float32, -bound2, bound2)   # torch fc2.weight.T
    b2 = jax.random.uniform(kb2, (D,), jnp.float32, -bound2, bound2)
    gamma = 1.0 + 0.1 * jax.random.normal(kg, (D,), jnp.float32)
    beta = 0.1 * jax.random.normal(kb, (D,), jnp.float32)
    return x, w1, b1, w2, b2, gamma, beta


if __name__ == "__main__":
    key = jax.random.PRNGKey(0)
    k_a, k_b = jax.random.split(key)

    # Case 1: f32 MXU path, many row tiles, decoupled (larger) pass-2 tile, stats combine.
    B, S, D, H = 4, 128, 128, 256
    args = _make_inputs(k_a, B, S, D, H)
    ref = _reference(*args)
    fwd_f32 = jax.jit(functools.partial(position_wise_feed_forward,
                                        block_rows=64, matmul_dtype=jnp.float32))
    out = jax.block_until_ready(fwd_f32(*args))
    assert out.shape == (B, S, D)
    assert jnp.allclose(out, ref, atol=5e-4, rtol=5e-4), float(jnp.max(jnp.abs(out - ref)))

    # Case 2: default bf16 MXU operands (fast path on v5e/v6e/v7x), f32 accumulation / BN math.
    fwd_bf16 = jax.jit(position_wise_feed_forward)
    out_bf16 = jax.block_until_ready(fwd_bf16(*args))
    assert jnp.allclose(out_bf16, ref, atol=3e-2, rtol=3e-2), float(jnp.max(jnp.abs(out_bf16 - ref)))

    # Case 3: forced hidden-dim streaming (block_h < H) -> exercises the accumulator grid axis.
    fwd_kt = jax.jit(functools.partial(position_wise_feed_forward,
                                       block_rows=64, block_h=128, matmul_dtype=jnp.float32))
    out_kt = jax.block_until_ready(fwd_kt(*args))
    assert jnp.allclose(out_kt, ref, atol=5e-4, rtol=5e-4), float(jnp.max(jnp.abs(out_kt - ref)))

    # Case 4: awkward shapes (D=32, H=64, N=14) -> lane/row zero-padding + padded-row stats
    # correction, checked on the exact f32 path.
    B2, S2, D2, H2 = 2, 7, 32, 64
    args2 = _make_inputs(k_b, B2, S2, D2, H2)
    ref2 = _reference(*args2)
    fwd2 = jax.jit(functools.partial(position_wise_feed_forward, matmul_dtype=jnp.float32))
    out2 = jax.block_until_ready(fwd2(*args2))
    assert out2.shape == (B2, S2, D2)
    assert jnp.allclose(out2, ref2, atol=5e-4, rtol=5e-4), float(jnp.max(jnp.abs(out2 - ref2)))

    print("KERNEL_OK")
</pallas_src>

<mosaic_0001>
module attributes {stable_mosaic.version = 11 : i64} {
  func.func @_ffn_stats_kernel(%arg0: i32, %arg1: i32, %arg2: memref<64x128xf32, #tpu.memory_space<vmem>>, %arg3: memref<128x256xf32, #tpu.memory_space<vmem>>, %arg4: memref<1x256xf32, #tpu.memory_space<vmem>>, %arg5: memref<256x128xf32, #tpu.memory_space<vmem>>, %arg6: memref<1x128xf32, #tpu.memory_space<vmem>>, %arg7: memref<64x128xf32, #tpu.memory_space<vmem>>, %arg8: memref<8x128xf32, #tpu.memory_space<vmem>>, %arg9: memref<64x128xf32, #tpu.memory_space<vmem>>) attributes {dimension_semantics = [#tpu.dimension_semantics<parallel>, #tpu.dimension_semantics<arbitrary>], iteration_bounds = array<i64: 8, 1>, scalar_prefetch = 0 : i64, scratch_operands = 1 : i64, tpu.core_type = #tpu.core_type<tc>, window_params = [{transform_indices = @transform_0, window_bounds = array<i64: 64, 128>}, {transform_indices = @transform_1, window_bounds = array<i64: 128, 256>}, {transform_indices = @transform_2, window_bounds = array<i64: 1, 256>}, {transform_indices = @transform_3, window_bounds = array<i64: 256, 128>}, {pipeline_mode = #tpu.pipeline_mode<synchronous>, transform_indices = @transform_4, window_bounds = array<i64: 1, 128>}, {transform_indices = @transform_5, window_bounds = array<i64: 64, 128>}, {transform_indices = @transform_6, window_bounds = array<i64: 8, 128>}]} {
    %c0 = arith.constant 0 : index
    %c0_0 = arith.constant 0 : index
    %0 = vector.load %arg2[%c0, %c0_0] : memref<64x128xf32, #tpu.memory_space<vmem>>, vector<64x128xf32>
    %c0_1 = arith.constant 0 : index
    %c0_2 = arith.constant 0 : index
    %1 = vector.load %arg3[%c0_1, %c0_2] : memref<128x256xf32, #tpu.memory_space<vmem>>, vector<128x256xf32>
    %cst = arith.constant dense<0.000000e+00> : vector<64x256xf32>
    %2 = tpu.matmul %0, %1, %cst {dimension_numbers = #tpu.dot_dimension_numbers<[1], [0], [0], [1], [0, 0, 1, 1], [], []>} : vector<64x128xf32>, vector<128x256xf32>, vector<64x256xf32> -> vector<64x256xf32>
    %c0_3 = arith.constant 0 : index
    %c0_4 = arith.constant 0 : index
    %3 = vector.load %arg4[%c0_3, %c0_4] : memref<1x256xf32, #tpu.memory_space<vmem>>, vector<1x256xf32>
    %4 = vector.broadcast %3 : vector<1x256xf32> to vector<64x256xf32>
    %5 = arith.addf %2, %4 : vector<64x256xf32>
    %cst_5 = arith.constant 0.000000e+00 : f32
    %6 = vector.broadcast %cst_5 : f32 to vector<64x256xf32>
    %7 = arith.maximumf %5, %6 : vector<64x256xf32>
    %c0_6 = arith.constant 0 : index
    %c0_7 = arith.constant 0 : index
    %8 = vector.load %arg5[%c0_6, %c0_7] : memref<256x128xf32, #tpu.memory_space<vmem>>, vector<256x128xf32>
    %cst_8 = arith.constant dense<0.000000e+00> : vector<64x128xf32>
    %9 = tpu.matmul %7, %8, %cst_8 {dimension_numbers = #tpu.dot_dimension_numbers<[1], [0], [0], [1], [0, 0, 1, 1], [], []>} : vector<64x256xf32>, vector<256x128xf32>, vector<64x128xf32> -> vector<64x128xf32>
    %c0_i32 = arith.constant 0 : i32
    %10 = arith.cmpi eq, %arg1, %c0_i32 : i32
    %11 = arith.extui %10 : i1 to i32
    %c0_i32_9 = arith.constant 0 : i32
    %12 = arith.cmpi ne, %11, %c0_i32_9 : i32
    scf.if %12 {
      %c0_14 = arith.constant 0 : index
      %c0_15 = arith.constant 0 : index
      %19 = vector.load %arg9[%c0_14, %c0_15] : memref<64x128xf32, #tpu.memory_space<vmem>>, vector<64x128xf32>
      tpu.vector_store %arg9[%c0_14, %c0_15], %9 {strides = array<i32>} : memref<64x128xf32, #tpu.memory_space<vmem>>, vector<64x128xf32>,
    } else {
    }
    %c0_i32_10 = arith.constant 0 : i32
    %13 = arith.cmpi sgt, %arg1, %c0_i32_10 : i32
    %14 = arith.extui %13 : i1 to i32
    %c0_i32_11 = arith.constant 0 : i32
    %15 = arith.cmpi ne, %14, %c0_i32_11 : i32
    scf.if %15 {
      %c0_14 = arith.constant 0 : index
      %c0_15 = arith.constant 0 : index
      %19 = vector.load %arg9[%c0_14, %c0_15] : memref<64x128xf32, #tpu.memory_space<vmem>>, vector<64x128xf32>
      %20 = arith.addf %19, %9 : vector<64x128xf32>
      %c0_16 = arith.constant 0 : index
      %c0_17 = arith.constant 0 : index
      %21 = vector.load %arg9[%c0_16, %c0_17] : memref<64x128xf32, #tpu.memory_space<vmem>>, vector<64x128xf32>
      tpu.vector_store %arg9[%c0_16, %c0_17], %20 {strides = array<i32>} : memref<64x128xf32, #tpu.memory_space<vmem>>, vector<64x128xf32>,
    } else {
    }
    %c0_i32_12 = arith.constant 0 : i32
    %16 = arith.cmpi eq, %arg1, %c0_i32_12 : i32
    %17 = arith.extui %16 : i1 to i32
    %c0_i32_13 = arith.constant 0 : i32
    %18 = arith.cmpi ne, %17, %c0_i32_13 : i32
    scf.if %18 {
      %c0_14 = arith.constant 0 : index
      %c0_15 = arith.constant 0 : index
      %19 = vector.load %arg9[%c0_14, %c0_15] : memref<64x128xf32, #tpu.memory_space<vmem>>, vector<64x128xf32>
      %c0_16 = arith.constant 0 : index
      %c0_17 = arith.constant 0 : index
      %20 = vector.load %arg6[%c0_16, %c0_17] : memref<1x128xf32, #tpu.memory_space<vmem>>, vector<1x128xf32>
      %21 = vector.broadcast %20 : vector<1x128xf32> to vector<64x128xf32>
      %22 = arith.addf %19, %21 : vector<64x128xf32>
      %23 = arith.addf %22, %0 : vector<64x128xf32>
      %c0_18 = arith.constant 0 : index
      %c0_19 = arith.constant 0 : index
      %24 = vector.load %arg7[%c0_18, %c0_19] : memref<64x128xf32, #tpu.memory_space<vmem>>, vector<64x128xf32>
      tpu.vector_store %arg7[%c0_18, %c0_19], %23 {strides = array<i32>} : memref<64x128xf32, #tpu.memory_space<vmem>>, vector<64x128xf32>,
      %cst_20 = arith.constant dense<0.000000e+00> : vector<128xf32>
      %25 = vector.multi_reduction <add>, %23, %cst_20 [0] : vector<64x128xf32> to vector<128xf32>
      %26 = vector.shape_cast %25 : vector<128xf32> to vector<1x128xf32>
      %27 = arith.mulf %23, %23 : vector<64x128xf32>
      %cst_21 = arith.constant dense<0.000000e+00> : vector<128xf32>
      %28 = vector.multi_reduction <add>, %27, %cst_21 [0] : vector<64x128xf32> to vector<128xf32>
      %29 = vector.shape_cast %28 : vector<128xf32> to vector<1x128xf32>
      %cst_22 = arith.constant 0.000000e+00 : f32
      %30 = vector.broadcast %cst_22 : f32 to vector<6x128xf32>
      %31 = tpu.concatenate %26, %29, %30 in 0 : vector<1x128xf32>, vector<1x128xf32>, vector<6x128xf32> -> vector<8x128xf32>
      %c0_23 = arith.constant 0 : index
      %c0_24 = arith.constant 0 : index
      %32 = vector.load %arg8[%c0_23, %c0_24] : memref<8x128xf32, #tpu.memory_space<vmem>>, vector<8x128xf32>
      tpu.vector_store %arg8[%c0_23, %c0_24], %31 {strides = array<i32>} : memref<8x128xf32, #tpu.memory_space<vmem>>, vector<8x128xf32>,
    } else {
    }
    return
  }
  func.func @transform_0(%arg0: i32, %arg1: i32) -> (i32, i32) {
    %c0_i32 = arith.constant 0 : i32
    %c0_i32_0 = arith.constant 0 : i32
    return %arg0, %c0_i32 : i32, i32
  }
  func.func @transform_1(%arg0: i32, %arg1: i32) -> (i32, i32) {
    %c0_i32 = arith.constant 0 : i32
    %c0_i32_0 = arith.constant 0 : i32
    return %c0_i32, %arg1 : i32, i32
  }
  func.func @transform_2(%arg0: i32, %arg1: i32) -> (i32, i32) {
    %c0_i32 = arith.constant 0 : i32
    %c0_i32_0 = arith.constant 0 : i32
    return %c0_i32, %arg1 : i32, i32
  }
  func.func @transform_3(%arg0: i32, %arg1: i32) -> (i32, i32) {
    %c0_i32 = arith.constant 0 : i32
    %c0_i32_0 = arith.constant 0 : i32
    return %arg1, %c0_i32 : i32, i32
  }
  func.func @transform_4(%arg0: i32, %arg1: i32) -> (i32, i32) {
    %c0_i32 = arith.constant 0 : i32
    %c0_i32_0 = arith.constant 0 : i32
    %c0_i32_1 = arith.constant 0 : i32
    return %c0_i32, %c0_i32_0 : i32, i32
  }
  func.func @transform_5(%arg0: i32, %arg1: i32) -> (i32, i32) {
    %c0_i32 = arith.constant 0 : i32
    %c0_i32_0 = arith.constant 0 : i32
    return %arg0, %c0_i32 : i32, i32
  }
  func.func @transform_6(%arg0: i32, %arg1: i32) -> (i32, i32) {
    %c0_i32 = arith.constant 0 : i32
    %c0_i32_0 = arith.constant 0 : i32
    return %arg0, %c0_i32 : i32, i32
  }
}

module attributes {stable_mosaic.version = 11 : i64} {
  func.func @_bn_apply_kernel(%arg0: i32, %arg1: memref<256x128xf32, #tpu.memory_space<vmem>>, %arg2: memref<1x128xf32, #tpu.memory_space<vmem>>, %arg3: memref<1x128xf32, #tpu.memory_space<vmem>>, %arg4: memref<256x128xf32, #tpu.memory_space<vmem>>) attributes {dimension_semantics = [#tpu.dimension_semantics<parallel>], iteration_bounds = array<i64: 2>, scalar_prefetch = 0 : i64, scratch_operands = 0 : i64, tpu.core_type = #tpu.core_type<tc>, window_params = [{transform_indices = @transform_0, window_bounds = array<i64: 256, 128>}, {pipeline_mode = #tpu.pipeline_mode<synchronous>, transform_indices = @transform_1, window_bounds = array<i64: 1, 128>}, {pipeline_mode = #tpu.pipeline_mode<synchronous>, transform_indices = @transform_2, window_bounds = array<i64: 1, 128>}, {transform_indices = @transform_3, window_bounds = array<i64: 256, 128>}]} {
    %c0 = arith.constant 0 : index
    %c0_0 = arith.constant 0 : index
    %0 = vector.load %arg1[%c0, %c0_0] : memref<256x128xf32, #tpu.memory_space<vmem>>, vector<256x128xf32>
    %c0_1 = arith.constant 0 : index
    %c0_2 = arith.constant 0 : index
    %1 = vector.load %arg2[%c0_1, %c0_2] : memref<1x128xf32, #tpu.memory_space<vmem>>, vector<1x128xf32>
    %2 = vector.broadcast %1 : vector<1x128xf32> to vector<256x128xf32>
    %3 = arith.mulf %0, %2 : vector<256x128xf32>
    %c0_3 = arith.constant 0 : index
    %c0_4 = arith.constant 0 : index
    %4 = vector.load %arg3[%c0_3, %c0_4] : memref<1x128xf32, #tpu.memory_space<vmem>>, vector<1x128xf32>
    %5 = vector.broadcast %4 : vector<1x128xf32> to vector<256x128xf32>
    %6 = arith.addf %3, %5 : vector<256x128xf32>
    %c0_5 = arith.constant 0 : index
    %c0_6 = arith.constant 0 : index
    %7 = vector.load %arg4[%c0_5, %c0_6] : memref<256x128xf32, #tpu.memory_space<vmem>>, vector<256x128xf32>
    tpu.vector_store %arg4[%c0_5, %c0_6], %6 {strides = array<i32>} : memref<256x128xf32, #tpu.memory_space<vmem>>, vector<256x128xf32>,
    return
  }
  func.func @transform_0(%arg0: i32) -> (i32, i32) {
    %c0_i32 = arith.constant 0 : i32
    %c0_i32_0 = arith.constant 0 : i32
    return %arg0, %c0_i32 : i32, i32
  }
  func.func @transform_1(%arg0: i32) -> (i32, i32) {
    %c0_i32 = arith.constant 0 : i32
    %c0_i32_0 = arith.constant 0 : i32
    %c0_i32_1 = arith.constant 0 : i32
    return %c0_i32, %c0_i32_0 : i32, i32
  }
  func.func @transform_2(%arg0: i32) -> (i32, i32) {
    %c0_i32 = arith.constant 0 : i32
    %c0_i32_0 = arith.constant 0 : i32
    %c0_i32_1 = arith.constant 0 : i32
    return %c0_i32, %c0_i32_0 : i32, i32
  }
  func.func @transform_3(%arg0: i32) -> (i32, i32) {
    %c0_i32 = arith.constant 0 : i32
    %c0_i32_0 = arith.constant 0 : i32
    return %arg0, %c0_i32 : i32, i32
  }
}

</mosaic_0001>

<llo_original>
// kernel: position_wise_feed_forward.3
$region0: #{position_wise_feed_forward.3}
  #allocation0 [shape = 'u32[]', space=smem, size = 0x4, offset = 0x4, fixed_abs, tag = 'smem constant byte address 0x4 - core index']
  #allocation1 [shape = 'u32[144,128]{1,0:T(1,128)}', space=vmem, size = 0x12000, scoped, tag = 'internal scratch']
  %s0 = inlined_call_operand.vmem [shape: f32[512,128], index: 0, kind: input, shape index: {}, may-alias: {0,3}]
  %s1 = inlined_call_operand.vmem [shape: f32[1,128], index: 1, kind: input, shape index: {}]
  %s2 = inlined_call_operand.vmem [shape: f32[1,128], index: 2, kind: input, shape index: {}]
  %s3 = inlined_call_operand.vmem [shape: f32[512,128], index: 3, kind: output, shape index: {}, may-alias: {0,3}]
  %s4 = sld [smem:[#allocation0]]
  $region45: #{position_wise_feed_forward.3} parent=0
    _
  %s6 = ssub.s32 1, %s4
  %s7 = scalar_select 0, %s6, %s4
  loop: start=0, step=1, limit=4
  $region2: #{position_wise_feed_forward.3} parent=0 // loop_pre_header
    _
  $region3: #{position_wise_feed_forward.3} parent=0 // loop_header
    %s9 = sphi 0, %s13
    %p10 = scmp.ge.s32.totalorder %s9, 4
    %s19 = sphi 0, %s21
    %s22 = sphi 0, %s19
    %s23 = sphi 0, %s22
    %s39 = sphi 0, %s23
    %s43 = sphi 0, %s43
    %s45 = sphi 0, %s43
    %s46 = sphi 0, %s45
    %s60 = sphi 0, %s46
    %s64 = sphi 0, %s64
    %s66 = sphi 0, %s64
    %s67 = sphi 0, %s66
    %s81 = sphi 0, %s67
    %s87 = sphi 0, %s89
    %s90 = sphi 0, %s87
    %s91 = sphi 0, %s90
    %s107 = sphi 0, %s91
  $region4: #{position_wise_feed_forward.3} parent=0 // loop_header_branch
    %12 = sbr.rel (%p10) target = $region8
  $region5: #{position_wise_feed_forward.3} parent=0 // loop_body
    %s14 = ssub.s32 %s9, 1
    %s15 = ssub.s32 %s9, 2
    %s16 = sadd.s32 %s9, 1
    %s17 = ssub.s32 %s9, %s16
    %p18 = scmp.eq.s32.totalorder %s17, 0
    %s20 = sadd.s32 %s19, 1
    %s21 = scalar_select %p18, %s19, %s20
    %p24 = pneg %p18
    %p25 = scmp.eq.s32.totalorder %s9, 1
    %p26 = por %p24, %p25
    %p27 = scmp.ne.s32.totalorder %s19, %s22
    %p28 = scmp.eq.s32.totalorder %s9, 0
    %p29 = por %p27, %p28
    %p30 = scmp.ne.s32.totalorder %s19, %s22
    %p31 = scmp.eq.s32.totalorder %s14, 1
    %p32 = por %p30, %p31
    %p33 = scmp.ne.s32.totalorder %s22, %s23
    %p34 = scmp.eq.s32.totalorder %s14, 0
    %p35 = por %p33, %p34
    %p36 = scmp.ne.s32.totalorder %s22, %s23
    %p37 = scmp.eq.s32.totalorder %s15, 1
    %p38 = por %p36, %p37
    %p40 = scmp.ne.s32.totalorder %s23, %s39
    %p41 = scmp.eq.s32.totalorder %s15, 0
    %p42 = por %p40, %p41
    %s44 = sadd.s32 %s43, 1
    %p47 = scmp.eq.s32.totalorder %s9, 1
    %p48 = scmp.ne.s32.totalorder %s43, %s45
    %p49 = scmp.eq.s32.totalorder %s9, 0
    %p50 = por %p48, %p49
    %p51 = scmp.ne.s32.totalorder %s43, %s45
    %p52 = scmp.eq.s32.totalorder %s14, 1
    %p53 = por %p51, %p52
    %p54 = scmp.ne.s32.totalorder %s45, %s46
    %p55 = scmp.eq.s32.totalorder %s14, 0
    %p56 = por %p54, %p55
    %p57 = scmp.ne.s32.totalorder %s45, %s46
    %p58 = scmp.eq.s32.totalorder %s15, 1
    %p59 = por %p57, %p58
    %p61 = scmp.ne.s32.totalorder %s46, %s60
    %p62 = scmp.eq.s32.totalorder %s15, 0
    %p63 = por %p61, %p62
    %s65 = sadd.s32 %s64, 1
    %p68 = scmp.eq.s32.totalorder %s9, 1
    %p69 = scmp.ne.s32.totalorder %s64, %s66
    %p70 = scmp.eq.s32.totalorder %s9, 0
    %p71 = por %p69, %p70
    %p72 = scmp.ne.s32.totalorder %s64, %s66
    %p73 = scmp.eq.s32.totalorder %s14, 1
    %p74 = por %p72, %p73
    %p75 = scmp.ne.s32.totalorder %s66, %s67
    %p76 = scmp.eq.s32.totalorder %s14, 0
    %p77 = por %p75, %p76
    %p78 = scmp.ne.s32.totalorder %s66, %s67
    %p79 = scmp.eq.s32.totalorder %s15, 1
    %p80 = por %p78, %p79
    %p82 = scmp.ne.s32.totalorder %s67, %s81
    %p83 = scmp.eq.s32.totalorder %s15, 0
    %p84 = por %p82, %p83
    %s85 = ssub.s32 %s9, %s16
    %p86 = scmp.eq.s32.totalorder %s85, 0
    %s88 = sadd.s32 %s87, 1
    %s89 = scalar_select %p86, %s87, %s88
    %p92 = pneg %p86
    %p93 = scmp.eq.s32.totalorder %s9, 1
    %p94 = por %p92, %p93
    %p95 = scmp.ne.s32.totalorder %s87, %s90
    %p96 = scmp.eq.s32.totalorder %s9, 0
    %p97 = por %p95, %p96
    %p98 = scmp.ne.s32.totalorder %s87, %s90
    %p99 = scmp.eq.s32.totalorder %s14, 1
    %p100 = por %p98, %p99
    %p101 = scmp.ne.s32.totalorder %s90, %s91
    %p102 = scmp.eq.s32.totalorder %s14, 0
    %p103 = por %p101, %p102
    %p104 = scmp.ne.s32.totalorder %s90, %s91
    %p105 = scmp.eq.s32.totalorder %s15, 1
    %p106 = por %p104, %p105
    %p108 = scmp.ne.s32.totalorder %s91, %s107
    %p109 = scmp.eq.s32.totalorder %s15, 0
    %p110 = por %p108, %p109
    %p111 = scmp.le.s32.totalorder 1, %s9
    %p112 = scmp.lt.s32.totalorder %s9, 3
    %p113 = pnand %p111, %p112
    %p114 = pneg %p113
    // Predicated region
    $region9: #{position_wise_feed_forward.3} parent=5 // pred_check
      _
    $region10: #{position_wise_feed_forward.3} parent=5 // pred_check_branch
      %116 = sbr.rel (%p113) target = $region12
    $region11: #{position_wise_feed_forward.3} parent=5 // pred_region
      %s117 = ssub.s32 %s9, 1
      // Predicated region
      $region13: #{position_wise_feed_forward.3} parent=11 // pred_check
        %p118 = pneg %p56
      $region14: #{position_wise_feed_forward.3} parent=11 // pred_check_branch
        %120 = sbr.rel (%p118) target = $region16
      $region15: #{position_wise_feed_forward.3} parent=11 // pred_region
        _
      $region16: #{position_wise_feed_forward.3} parent=11 // pred_fallthru
        _
      // Predicated region
      $region17: #{position_wise_feed_forward.3} parent=11 // pred_check
        %p121 = pneg %p77
      $region18: #{position_wise_feed_forward.3} parent=11 // pred_check_branch
        %123 = sbr.rel (%p121) target = $region20
      $region19: #{position_wise_feed_forward.3} parent=11 // pred_region
        _
      $region20: #{position_wise_feed_forward.3} parent=11 // pred_fallthru
        _
    $region12: #{position_wise_feed_forward.3} parent=5 // pred_fallthru
      _
    %p124 = scmp.lt.s32.totalorder %s9, 2
    // Predicated region
    $region21: #{position_wise_feed_forward.3} parent=5 // pred_check
      %p125 = pneg %p124
    $region22: #{position_wise_feed_forward.3} parent=5 // pred_check_branch
      %127 = sbr.rel (%p125) target = $region24
    $region23: #{position_wise_feed_forward.3} parent=5 // pred_region
      // Predicated region
      $region25: #{position_wise_feed_forward.3} parent=23 // pred_check
        %p128 = pneg %p29
      $region26: #{position_wise_feed_forward.3} parent=23 // pred_check_branch
        %130 = sbr.rel (%p128) target = $region28
      $region27: #{position_wise_feed_forward.3} parent=23 // pred_region
        %s131 = smul.u32 32, %s9
        %p132 = scmp.lt.s32.totalorder %s131, 63
        %s133 = scalar_select %p132, %s131, 63
        %s134 = smul.addr %s133, 8
        %s135 = scalar_lea.vmem %s0, %s134
        %s136 = smul.u32 32, %s9
      $region28: #{position_wise_feed_forward.3} parent=23 // pred_fallthru
        _
    $region24: #{position_wise_feed_forward.3} parent=5 // pred_fallthru
      _
    %p137 = scmp.le.s32.totalorder 1, %s9
    %p138 = scmp.lt.s32.totalorder %s9, 3
    %p139 = pnand %p137, %p138
    %p140 = pneg %p139
    // Predicated region
    $region29: #{position_wise_feed_forward.3} parent=5 // pred_check
      _
    $region30: #{position_wise_feed_forward.3} parent=5 // pred_check_branch
      %142 = sbr.rel (%p139) target = $region32
    $region31: #{position_wise_feed_forward.3} parent=5 // pred_region
      %s143 = ssub.s32 %s9, 1
      %s144 = smul.u32 32, %s14
      %p145 = scmp.lt.s32.totalorder %s144, 63
      %s146 = scalar_select %p145, %s144, 63
      %s147 = smul.addr %s146, 8
      %s148 = scalar_lea.vmem %s0, %s147
      %p149 = pneg %p35
      %p150 = pneg %p32
      %p151 = pneg %p56
      %p152 = pneg %p53
      %p153 = pneg %p77
      %p154 = pneg %p74
      %p155 = pneg %p103
      %p156 = pneg %p100
      %s157 = smul.u32 32, %s14
      %p158 = scmp.lt.s32.totalorder %s157, 63
      %s159 = scalar_select %p158, %s157, 63
      %s160 = smul.addr %s159, 8
      %s161 = scalar_lea.vmem %s3, %s160
      %s162 = smul.u32 32, %s14
      %p163 = scmp.lt.s32.totalorder %s162, 63
      %s164 = scalar_select %p163, %s162, 63
      %s165 = smul.addr %s164, 8
      %s166 = scalar_lea.vmem %s0, %s165
      %s167 = smul.u32 32, %s14
      %s168 = smul.u32 32, %s14
      %p169 = scmp.lt.s32.totalorder %s168, 63
      %s170 = scalar_select %p169, %s168, 63
      %s171 = smul.addr %s170, 8
      %s172 = scalar_lea.vmem %s3, %s171
      %s173 = smul.u32 32, %s14
      %v174 = vld [vmem:[%s166] sm:$0xff]
      %v175 = vld [vmem:[%s166 + $0x8] sm:$0xff]
      %v176 = vld [vmem:[%s166 + $0x10] sm:$0xff]
      %v177 = vld [vmem:[%s166 + $0x18] sm:$0xff]
      %v178 = vld [vmem:[%s166 + $0x20] sm:$0xff]
      %v179 = vld [vmem:[%s166 + $0x28] sm:$0xff]
      %v180 = vld [vmem:[%s166 + $0x30] sm:$0xff]
      %v181 = vld [vmem:[%s166 + $0x38] sm:$0xff]
      %v182 = vld [vmem:[%s166 + $0x40] sm:$0xff]
      %v183 = vld [vmem:[%s166 + $0x48] sm:$0xff]
      %v184 = vld [vmem:[%s166 + $0x50] sm:$0xff]
      %v185 = vld [vmem:[%s166 + $0x58] sm:$0xff]
      %v186 = vld [vmem:[%s166 + $0x60] sm:$0xff]
      %v187 = vld [vmem:[%s166 + $0x68] sm:$0xff]
      %v188 = vld [vmem:[%s166 + $0x70] sm:$0xff]
      %v189 = vld [vmem:[%s166 + $0x78] sm:$0xff]
      %v190 = vld [vmem:[%s166 + $0x80] sm:$0xff]
      %v191 = vld [vmem:[%s166 + $0x88] sm:$0xff]
      %v192 = vld [vmem:[%s166 + $0x90] sm:$0xff]
      %v193 = vld [vmem:[%s166 + $0x98] sm:$0xff]
      %v194 = vld [vmem:[%s166 + $0xa0] sm:$0xff]
      %v195 = vld [vmem:[%s166 + $0xa8] sm:$0xff]
      %v196 = vld [vmem:[%s166 + $0xb0] sm:$0xff]
      %v197 = vld [vmem:[%s166 + $0xb8] sm:$0xff]
      %v198 = vld [vmem:[%s166 + $0xc0] sm:$0xff]
      %v199 = vld [vmem:[%s166 + $0xc8] sm:$0xff]
      %v200 = vld [vmem:[%s166 + $0xd0] sm:$0xff]
      %v201 = vld [vmem:[%s166 + $0xd8] sm:$0xff]
      %v202 = vld [vmem:[%s166 + $0xe0] sm:$0xff]
      %v203 = vld [vmem:[%s166 + $0xe8] sm:$0xff]
      %v204 = vld [vmem:[%s166 + $0xf0] sm:$0xff]
      %v205 = vld [vmem:[%s166 + $0xf8] sm:$0xff]
      %v206 = vld [vmem:[%s1] sm:$0x1]
      %v208 = vlaneseq
      %v209 = vshrl.u32 %v208, 7
      %v210 = vsub.s32 0, %v209
      %v211 = vrot.slane %v206, %v210
      %v213 = vmul.f32 %v174, %v211
      %v214 = vmul.f32 %v175, %v211
      %v215 = vmul.f32 %v176, %v211
      %v216 = vmul.f32 %v177, %v211
      %v217 = vmul.f32 %v178, %v211
      %v218 = vmul.f32 %v179, %v211
      %v219 = vmul.f32 %v180, %v211
      %v220 = vmul.f32 %v181, %v211
      %v221 = vmul.f32 %v182, %v211
      %v222 = vmul.f32 %v183, %v211
      %v223 = vmul.f32 %v184, %v211
      %v224 = vmul.f32 %v185, %v211
      %v225 = vmul.f32 %v186, %v211
      %v226 = vmul.f32 %v187, %v211
      %v227 = vmul.f32 %v188, %v211
      %v228 = vmul.f32 %v189, %v211
      %v229 = vmul.f32 %v190, %v211
      %v230 = vmul.f32 %v191, %v211
      %v231 = vmul.f32 %v192, %v211
      %v232 = vmul.f32 %v193, %v211
      %v233 = vmul.f32 %v194, %v211
      %v234 = vmul.f32 %v195, %v211
      %v235 = vmul.f32 %v196, %v211
      %v236 = vmul.f32 %v197, %v211
      %v237 = vmul.f32 %v198, %v211
      %v238 = vmul.f32 %v199, %v211
      %v239 = vmul.f32 %v200, %v211
      %v240 = vmul.f32 %v201, %v211
      %v241 = vmul.f32 %v202, %v211
      %v242 = vmul.f32 %v203, %v211
      %v243 = vmul.f32 %v204, %v211
      %v244 = vmul.f32 %v205, %v211
      %v245 = vld [vmem:[%s2] sm:$0x1]
      %v247 = vlaneseq
      %v248 = vshrl.u32 %v247, 7
      %v249 = vsub.s32 0, %v248
      %v250 = vrot.slane %v245, %v249
      %v252 = vadd.f32 %v213, %v250
      %v253 = vadd.f32 %v214, %v250
      %v254 = vadd.f32 %v215, %v250
      %v255 = vadd.f32 %v216, %v250
      %v256 = vadd.f32 %v217, %v250
      %v257 = vadd.f32 %v218, %v250
      %v258 = vadd.f32 %v219, %v250
      %v259 = vadd.f32 %v220, %v250
      %v260 = vadd.f32 %v221, %v250
      %v261 = vadd.f32 %v222, %v250
      %v262 = vadd.f32 %v223, %v250
      %v263 = vadd.f32 %v224, %v250
      %v264 = vadd.f32 %v225, %v250
      %v265 = vadd.f32 %v226, %v250
      %v266 = vadd.f32 %v227, %v250
      %v267 = vadd.f32 %v228, %v250
      %v268 = vadd.f32 %v229, %v250
      %v269 = vadd.f32 %v230, %v250
      %v270 = vadd.f32 %v231, %v250
      %v271 = vadd.f32 %v232, %v250
      %v272 = vadd.f32 %v233, %v250
      %v273 = vadd.f32 %v234, %v250
      %v274 = vadd.f32 %v235, %v250
      %v275 = vadd.f32 %v236, %v250
      %v276 = vadd.f32 %v237, %v250
      %v277 = vadd.f32 %v238, %v250
      %v278 = vadd.f32 %v239, %v250
      %v279 = vadd.f32 %v240, %v250
      %v280 = vadd.f32 %v241, %v250
      %v281 = vadd.f32 %v242, %v250
      %v282 = vadd.f32 %v243, %v250
      %v283 = vadd.f32 %v244, %v250
      %284 = vst [vmem:[%s172] sm:$0xff] %v252
      %285 = vst [vmem:[%s172 + $0x8] sm:$0xff] %v253
      %286 = vst [vmem:[%s172 + $0x10] sm:$0xff] %v254
      %287 = vst [vmem:[%s172 + $0x18] sm:$0xff] %v255
      %288 = vst [vmem:[%s172 + $0x20] sm:$0xff] %v256
      %289 = vst [vmem:[%s172 + $0x28] sm:$0xff] %v257
      %290 = vst [vmem:[%s172 + $0x30] sm:$0xff] %v258
      %291 = vst [vmem:[%s172 + $0x38] sm:$0xff] %v259
      %292 = vst [vmem:[%s172 + $0x40] sm:$0xff] %v260
      %293 = vst [vmem:[%s172 + $0x48] sm:$0xff] %v261
      %294 = vst [vmem:[%s172 + $0x50] sm:$0xff] %v262
      %295 = vst [vmem:[%s172 + $0x58] sm:$0xff] %v263
      %296 = vst [vmem:[%s172 + $0x60] sm:$0xff] %v264
      %297 = vst [vmem:[%s172 + $0x68] sm:$0xff] %v265
      %298 = vst [vmem:[%s172 + $0x70] sm:$0xff] %v266
      %299 = vst [vmem:[%s172 + $0x78] sm:$0xff] %v267
      %300 = vst [vmem:[%s172 + $0x80] sm:$0xff] %v268
      %301 = vst [vmem:[%s172 + $0x88] sm:$0xff] %v269
      %302 = vst [vmem:[%s172 + $0x90] sm:$0xff] %v270
      %303 = vst [vmem:[%s172 + $0x98] sm:$0xff] %v271
      %304 = vst [vmem:[%s172 + $0xa0] sm:$0xff] %v272
      %305 = vst [vmem:[%s172 + $0xa8] sm:$0xff] %v273
      %306 = vst [vmem:[%s172 + $0xb0] sm:$0xff] %v274
      %307 = vst [vmem:[%s172 + $0xb8] sm:$0xff] %v275
      %308 = vst [vmem:[%s172 + $0xc0] sm:$0xff] %v276
      %309 = vst [vmem:[%s172 + $0xc8] sm:$0xff] %v277
      %310 = vst [vmem:[%s172 + $0xd0] sm:$0xff] %v278
      %311 = vst [vmem:[%s172 + $0xd8] sm:$0xff] %v279
      %312 = vst [vmem:[%s172 + $0xe0] sm:$0xff] %v280
      %313 = vst [vmem:[%s172 + $0xe8] sm:$0xff] %v281
      %314 = vst [vmem:[%s172 + $0xf0] sm:$0xff] %v282
      %315 = vst [vmem:[%s172 + $0xf8] sm:$0xff] %v283
      %s316 = smul.u32 32, %s14
      %p317 = scmp.lt.s32.totalorder %s316, 63
      %s318 = scalar_select %p317, %s316, 63
      %s319 = smul.addr %s318, 8
      %s320 = scalar_lea.vmem %s3, %s319
      // Predicated region
      $region33: #{position_wise_feed_forward.3} parent=31 // pred_check
        %p321 = pneg %p100
      $region34: #{position_wise_feed_forward.3} parent=31 // pred_check_branch
        %323 = sbr.rel (%p321) target = $region36
      $region35: #{position_wise_feed_forward.3} parent=31 // pred_region
        %s324 = smul.u32 32, %s14
      $region36: #{position_wise_feed_forward.3} parent=31 // pred_fallthru
        _
    $region32: #{position_wise_feed_forward.3} parent=5 // pred_fallthru
      _
    %p325 = scmp.le.s32.totalorder 2, %s9
    // Predicated region
    $region37: #{position_wise_feed_forward.3} parent=5 // pred_check
      %p326 = pneg %p325
    $region38: #{position_wise_feed_forward.3} parent=5 // pred_check_branch
      %328 = sbr.rel (%p326) target = $region40
    $region39: #{position_wise_feed_forward.3} parent=5 // pred_region
      %s329 = ssub.s32 %s9, 2
      // Predicated region
      $region41: #{position_wise_feed_forward.3} parent=39 // pred_check
        %p330 = pneg %p106
      $region42: #{position_wise_feed_forward.3} parent=39 // pred_check_branch
        %332 = sbr.rel (%p330) target = $region44
      $region43: #{position_wise_feed_forward.3} parent=39 // pred_region
        %s333 = smul.u32 32, %s15
        %p334 = scmp.lt.s32.totalorder %s333, 63
        %s335 = scalar_select %p334, %s333, 63
        %s336 = smul.addr %s335, 8
        %s337 = scalar_lea.vmem %s3, %s336
      $region44: #{position_wise_feed_forward.3} parent=39 // pred_fallthru
        _
    $region40: #{position_wise_feed_forward.3} parent=5 // pred_fallthru
      _
  $region6: #{position_wise_feed_forward.3} parent=0 // loop_footer
    %s13 = sadd.s32 1, %s9
  $region7: #{position_wise_feed_forward.3} parent=0 // loop_footer_branch
    %8 = sbr.rel target = $region3
  $region8: #{position_wise_feed_forward.3} parent=0 // loop_exit
    _

// kernel: position_wise_feed_forward.2
$region0: #{position_wise_feed_forward.2}
  #allocation0 [shape = 'u32[]', space=smem, size = 0x4, offset = 0x4, fixed_abs, tag = 'smem constant byte address 0x4 - core index']
  #allocation1 [shape = 'u32[144,128]{1,0:T(1,128)}', space=vmem, size = 0x12000, scoped, tag = 'internal scratch']
  #allocation2 [shape = 'f32[64,128]{1,0:T(8,128)}', space=vmem, size = 0x8000, scoped, tag = 'scratch operand']
  %s0 = inlined_call_operand.hbm [shape: f32[512,128], index: 0, kind: input, shape index: {}]
  %s1 = inlined_call_operand.hbm [shape: f32[128,256], index: 1, kind: input, shape index: {}]
  %s2 = inlined_call_operand.vmem [shape: f32[1,256], index: 2, kind: input, shape index: {}]
  %s3 = inlined_call_operand.hbm [shape: f32[256,128], index: 3, kind: input, shape index: {}]
  %s4 = inlined_call_operand.vmem [shape: f32[1,128], index: 4, kind: input, shape index: {}]
  %s5 = inlined_call_operand.vmem [shape: f32[512,128], index: 5, kind: output, shape index: {0}]
  %s6 = inlined_call_operand.vmem [shape: f32[64,128], index: 6, kind: output, shape index: {1}]
  %7 = xla_tuple %s5, %s6
  %s8 = sld [smem:[#allocation0]]
  $region85: #{position_wise_feed_forward.2} parent=0
    _
  %s10 = ssub.s32 1, %s8
  %s11 = scalar_select 0, %s10, %s8
  $region1: #{position_wise_feed_forward.2} parent=0
    #allocation3 [shape = 'u8[65536]{0}', space=vmem, size = 0x10000, scoped, tag = 'input window, operand 0']
    #allocation4 [shape = 's32[2]{0}', space=sflag, size = 0x8, scoped, tag = 'scoped memory for position_wise_feed_forward.2']
    #allocation5 [shape = 'u8[131072]{0}', space=vmem, size = 0x20000, scoped, tag = 'input window, operand 1, single buffered']
    #allocation6 [shape = 's32[1]{0}', space=sflag, size = 0x4, scoped, tag = 'scoped memory for position_wise_feed_forward.2']
    #allocation7 [shape = 'u8[131072]{0}', space=vmem, size = 0x20000, scoped, tag = 'input window, operand 3, single buffered']
    %12 = vsyncpa [#allocation4], 0
    %s13 = scalar_lea.sflag [#allocation4], 1
    %14 = vsyncpa %s13, 0
    %15 = vsyncpa [#allocation6], 0
    loop: start=0, step=1, limit=10
    $region2: #{position_wise_feed_forward.2} parent=1 // loop_pre_header
      _
    $region3: #{position_wise_feed_forward.2} parent=1 // loop_header
      %s17 = sphi 0, %s21
      %p18 = scmp.ge.s32.totalorder %s17, 10
      %s24 = sphi 0, %s36
      %s25 = sphi 0, %s32
      %s26 = sphi 0, %s24
      %s27 = sphi 0, %s25
      %s28 = sphi 0, %s26
      %s29 = sphi 0, %s27
      %s39 = sphi 0, %s41
      %s42 = sphi 0, %s39
      %s43 = sphi 0, %s42
      %s59 = sphi 0, %s43
      %s65 = sphi 0, %s67
      %s68 = sphi 0, %s65
      %s69 = sphi 0, %s68
      %s85 = sphi 0, %s69
      %s91 = sphi 0, %s93
      %s94 = sphi 0, %s91
      %s95 = sphi 0, %s94
      %s111 = sphi 0, %s95
      %s117 = sphi 0, %s119
      %s120 = sphi 0, %s117
      %s121 = sphi 0, %s120
      %s137 = sphi 0, %s121
      %s141 = sphi 0, %s141
      %s143 = sphi 0, %s141
      %s144 = sphi 0, %s143
      %s158 = sphi 0, %s144
      %s164 = sphi 0, %s166
      %s167 = sphi 0, %s164
      %s168 = sphi 0, %s167
      %s184 = sphi 0, %s168
      %s190 = sphi 0, %s192
      %s193 = sphi 0, %s190
      %s194 = sphi 0, %s193
      %s210 = sphi 0, %s194
    $region4: #{position_wise_feed_forward.2} parent=1 // loop_header_branch
      %20 = sbr.rel (%p18) target = $region8
    $region5: #{position_wise_feed_forward.2} parent=1 // loop_body
      %s22 = ssub.s32 %s17, 1
      %s23 = ssub.s32 %s17, 2
      %s30 = sadd.s32 1, %s25
      %p31 = scmp.ge.s32.totalorder %s30, 1
      %s32 = scalar_select %p31, 0, %s30
      %s33 = sadd.s32 1, %s24
      %s34 = scalar_select %p31, %s33, %s24
      %p35 = scmp.ge.s32.totalorder %s34, 8
      %s36 = scalar_select %p35, 0, %s34
      %s37 = ssub.s32 %s24, %s36
      %p38 = scmp.eq.s32.totalorder %s37, 0
      %s40 = sadd.s32 %s39, 1
      %s41 = scalar_select %p38, %s39, %s40
      %p44 = pneg %p38
      %p45 = scmp.eq.s32.totalorder %s17, 7
      %p46 = por %p44, %p45
      %p47 = scmp.ne.s32.totalorder %s39, %s42
      %p48 = scmp.eq.s32.totalorder %s17, 0
      %p49 = por %p47, %p48
      %p50 = scmp.ne.s32.totalorder %s39, %s42
      %p51 = scmp.eq.s32.totalorder %s22, 7
      %p52 = por %p50, %p51
      %p53 = scmp.ne.s32.totalorder %s42, %s43
      %p54 = scmp.eq.s32.totalorder %s22, 0
      %p55 = por %p53, %p54
      %p56 = scmp.ne.s32.totalorder %s42, %s43
      %p57 = scmp.eq.s32.totalorder %s23, 7
      %p58 = por %p56, %p57
      %p60 = scmp.ne.s32.totalorder %s43, %s59
      %p61 = scmp.eq.s32.totalorder %s23, 0
      %p62 = por %p60, %p61
      %s63 = ssub.s32 %s25, %s32
      %p64 = scmp.eq.s32.totalorder %s63, 0
      %s66 = sadd.s32 %s65, 1
      %s67 = scalar_select %p64, %s65, %s66
      %p70 = pneg %p64
      %p71 = scmp.eq.s32.totalorder %s17, 7
      %p72 = por %p70, %p71
      %p73 = scmp.ne.s32.totalorder %s65, %s68
      %p74 = scmp.eq.s32.totalorder %s17, 0
      %p75 = por %p73, %p74
      %p76 = scmp.ne.s32.totalorder %s65, %s68
      %p77 = scmp.eq.s32.totalorder %s22, 7
      %p78 = por %p76, %p77
      %p79 = scmp.ne.s32.totalorder %s68, %s69
      %p80 = scmp.eq.s32.totalorder %s22, 0
      %p81 = por %p79, %p80
      %p82 = scmp.ne.s32.totalorder %s68, %s69
      %p83 = scmp.eq.s32.totalorder %s23, 7
      %p84 = por %p82, %p83
      %p86 = scmp.ne.s32.totalorder %s69, %s85
      %p87 = scmp.eq.s32.totalorder %s23, 0
      %p88 = por %p86, %p87
      %s89 = ssub.s32 %s25, %s32
      %p90 = scmp.eq.s32.totalorder %s89, 0
      %s92 = sadd.s32 %s91, 1
      %s93 = scalar_select %p90, %s91, %s92
      %p96 = pneg %p90
      %p97 = scmp.eq.s32.totalorder %s17, 7
      %p98 = por %p96, %p97
      %p99 = scmp.ne.s32.totalorder %s91, %s94
      %p100 = scmp.eq.s32.totalorder %s17, 0
      %p101 = por %p99, %p100
      %p102 = scmp.ne.s32.totalorder %s91, %s94
      %p103 = scmp.eq.s32.totalorder %s22, 7
      %p104 = por %p102, %p103
      %p105 = scmp.ne.s32.totalorder %s94, %s95
      %p106 = scmp.eq.s32.totalorder %s22, 0
      %p107 = por %p105, %p106
      %p108 = scmp.ne.s32.totalorder %s94, %s95
      %p109 = scmp.eq.s32.totalorder %s23, 7
      %p110 = por %p108, %p109
      %p112 = scmp.ne.s32.totalorder %s95, %s111
      %p113 = scmp.eq.s32.totalorder %s23, 0
      %p114 = por %p112, %p113
      %s115 = ssub.s32 %s25, %s32
      %p116 = scmp.eq.s32.totalorder %s115, 0
      %s118 = sadd.s32 %s117, 1
      %s119 = scalar_select %p116, %s117, %s118
      %p122 = pneg %p116
      %p123 = scmp.eq.s32.totalorder %s17, 7
      %p124 = por %p122, %p123
      %p125 = scmp.ne.s32.totalorder %s117, %s120
      %p126 = scmp.eq.s32.totalorder %s17, 0
      %p127 = por %p125, %p126
      %p128 = scmp.ne.s32.totalorder %s117, %s120
      %p129 = scmp.eq.s32.totalorder %s22, 7
      %p130 = por %p128, %p129
      %p131 = scmp.ne.s32.totalorder %s120, %s121
      %p132 = scmp.eq.s32.totalorder %s22, 0
      %p133 = por %p131, %p132
      %p134 = scmp.ne.s32.totalorder %s120, %s121
      %p135 = scmp.eq.s32.totalorder %s23, 7
      %p136 = por %p134, %p135
      %p138 = scmp.ne.s32.totalorder %s121, %s137
      %p139 = scmp.eq.s32.totalorder %s23, 0
      %p140 = por %p138, %p139
      %s142 = sadd.s32 %s141, 1
      %p145 = scmp.eq.s32.totalorder %s17, 7
      %p146 = scmp.ne.s32.totalorder %s141, %s143
      %p147 = scmp.eq.s32.totalorder %s17, 0
      %p148 = por %p146, %p147
      %p149 = scmp.ne.s32.totalorder %s141, %s143
      %p150 = scmp.eq.s32.totalorder %s22, 7
      %p151 = por %p149, %p150
      %p152 = scmp.ne.s32.totalorder %s143, %s144
      %p153 = scmp.eq.s32.totalorder %s22, 0
      %p154 = por %p152, %p153
      %p155 = scmp.ne.s32.totalorder %s143, %s144
      %p156 = scmp.eq.s32.totalorder %s23, 7
      %p157 = por %p155, %p156
      %p159 = scmp.ne.s32.totalorder %s144, %s158
      %p160 = scmp.eq.s32.totalorder %s23, 0
      %p161 = por %p159, %p160
      %s162 = ssub.s32 %s24, %s36
      %p163 = scmp.eq.s32.totalorder %s162, 0
      %s165 = sadd.s32 %s164, 1
      %s166 = scalar_select %p163, %s164, %s165
      %p169 = pneg %p163
      %p170 = scmp.eq.s32.totalorder %s17, 7
      %p171 = por %p169, %p170
      %p172 = scmp.ne.s32.totalorder %s164, %s167
      %p173 = scmp.eq.s32.totalorder %s17, 0
      %p174 = por %p172, %p173
      %p175 = scmp.ne.s32.totalorder %s164, %s167
      %p176 = scmp.eq.s32.totalorder %s22, 7
      %p177 = por %p175, %p176
      %p178 = scmp.ne.s32.totalorder %s167, %s168
      %p179 = scmp.eq.s32.totalorder %s22, 0
      %p180 = por %p178, %p179
      %p181 = scmp.ne.s32.totalorder %s167, %s168
      %p182 = scmp.eq.s32.totalorder %s23, 7
      %p183 = por %p181, %p182
      %p185 = scmp.ne.s32.totalorder %s168, %s184
      %p186 = scmp.eq.s32.totalorder %s23, 0
      %p187 = por %p185, %p186
      %s188 = ssub.s32 %s24, %s36
      %p189 = scmp.eq.s32.totalorder %s188, 0
      %s191 = sadd.s32 %s190, 1
      %s192 = scalar_select %p189, %s190, %s191
      %p195 = pneg %p189
      %p196 = scmp.eq.s32.totalorder %s17, 7
      %p197 = por %p195, %p196
      %p198 = scmp.ne.s32.totalorder %s190, %s193
      %p199 = scmp.eq.s32.totalorder %s17, 0
      %p200 = por %p198, %p199
      %p201 = scmp.ne.s32.totalorder %s190, %s193
      %p202 = scmp.eq.s32.totalorder %s22, 7
      %p203 = por %p201, %p202
      %p204 = scmp.ne.s32.totalorder %s193, %s194
      %p205 = scmp.eq.s32.totalorder %s22, 0
      %p206 = por %p204, %p205
      %p207 = scmp.ne.s32.totalorder %s193, %s194
      %p208 = scmp.eq.s32.totalorder %s23, 7
      %p209 = por %p207, %p208
      %p211 = scmp.ne.s32.totalorder %s194, %s210
      %p212 = scmp.eq.s32.totalorder %s23, 0
      %p213 = por %p211, %p212
      %p214 = scmp.le.s32.totalorder 1, %s17
      %p215 = scmp.lt.s32.totalorder %s17, 9
      %p216 = pnand %p214, %p215
      %p217 = pneg %p216
      // Predicated region
      $region9: #{position_wise_feed_forward.2} parent=5 // pred_check
        _
      $region10: #{position_wise_feed_forward.2} parent=5 // pred_check_branch
        %219 = sbr.rel (%p216) target = $region12
      $region11: #{position_wise_feed_forward.2} parent=5 // pred_region
        %s220 = ssub.s32 %s17, 1
        // Predicated region
        $region13: #{position_wise_feed_forward.2} parent=11 // pred_check
          %p221 = pneg %p81
        $region14: #{position_wise_feed_forward.2} parent=11 // pred_check_branch
          %223 = sbr.rel (%p221) target = $region16
        $region15: #{position_wise_feed_forward.2} parent=11 // pred_region
          %s224 = smul.u32 2, %s27
          %s226 = ssub.s32 4096, 4096
          %227 = vsyncadd [#allocation6], %s226
          %s228 = smul.addr %s224, 128
          %s229 = scalar_lea.hbm %s1, %s228
          %s230 = sshll.u32 [#allocation5], 4
          %s231 = int_to_ptr.vmem [resolvable:$true] %s230
          %236 = dma.hbm_to_vmem [thread:$0]  %s229, 4096, %s231, [#allocation6], 256, 256, 16
        $region16: #{position_wise_feed_forward.2} parent=11 // pred_fallthru
          _
        // Predicated region
        $region17: #{position_wise_feed_forward.2} parent=11 // pred_check
          %p237 = pneg %p107
        $region18: #{position_wise_feed_forward.2} parent=11 // pred_check_branch
          %239 = sbr.rel (%p237) target = $region20
        $region19: #{position_wise_feed_forward.2} parent=11 // pred_region
          %s240 = smul.u32 2, %s27
          %p241 = scmp.lt.s32.totalorder %s240, 1
          %s242 = scalar_select %p241, %s240, 1
          %s243 = scalar_lea.vmem %s2, %s242
          %s244 = smul.u32 2, %s27
        $region20: #{position_wise_feed_forward.2} parent=11 // pred_fallthru
          _
        // Predicated region
        $region21: #{position_wise_feed_forward.2} parent=11 // pred_check
          %p245 = pneg %p133
        $region22: #{position_wise_feed_forward.2} parent=11 // pred_check_branch
          %247 = sbr.rel (%p245) target = $region24
        $region23: #{position_wise_feed_forward.2} parent=11 // pred_region
          %s248 = smul.u32 32, %s27
          %s250 = ssub.s32 4096, 4096
          %251 = vsyncadd [#allocation6], %s250
          %s252 = smul.addr %s248, 128
          %s253 = scalar_lea.hbm %s3, %s252
          %s254 = sshll.u32 [#allocation7], 4
          %s255 = int_to_ptr.vmem [resolvable:$true] %s254
          %260 = dma.hbm_to_vmem [thread:$0]  %s253, 4096, %s255, [#allocation6], 128, 128, 8
        $region24: #{position_wise_feed_forward.2} parent=11 // pred_fallthru
          _
        // Predicated region
        $region25: #{position_wise_feed_forward.2} parent=11 // pred_check
          %p261 = pneg %p154
        $region26: #{position_wise_feed_forward.2} parent=11 // pred_check_branch
          %263 = sbr.rel (%p261) target = $region28
        $region27: #{position_wise_feed_forward.2} parent=11 // pred_region
          _
        $region28: #{position_wise_feed_forward.2} parent=11 // pred_fallthru
          _
      $region12: #{position_wise_feed_forward.2} parent=5 // pred_fallthru
        _
      %p264 = scmp.lt.s32.totalorder %s17, 8
      // Predicated region
      $region29: #{position_wise_feed_forward.2} parent=5 // pred_check
        %p265 = pneg %p264
      $region30: #{position_wise_feed_forward.2} parent=5 // pred_check_branch
        %267 = sbr.rel (%p265) target = $region32
      $region31: #{position_wise_feed_forward.2} parent=5 // pred_region
        // Predicated region
        $region33: #{position_wise_feed_forward.2} parent=31 // pred_check
          %p268 = pneg %p49
        $region34: #{position_wise_feed_forward.2} parent=31 // pred_check_branch
          %270 = sbr.rel (%p268) target = $region36
        $region35: #{position_wise_feed_forward.2} parent=31 // pred_region
          %s271 = sand.u32 %s39, 1
          %s272 = scalar_lea.sflag [#allocation4], %s271
          %s273 = sand.u32 %s39, 1
          %s274 = smul.addr %s273, 64
          %s275 = scalar_lea.vmem [#allocation3], %s274
          %s276 = smul.u32 8, %s24
          %s278 = ssub.s32 1024, 1024
          %279 = vsyncadd %s272, %s278
          %s280 = smul.addr %s276, 128
          %s281 = scalar_lea.hbm %s0, %s280
          %s282 = sshll.u32 %s275, 4
          %s283 = int_to_ptr.vmem [resolvable:$true] %s282
          %288 = dma.hbm_to_vmem [thread:$0]  %s281, 1024, %s283, %s272, 128, 128, 8
        $region36: #{position_wise_feed_forward.2} parent=31 // pred_fallthru
          _
      $region32: #{position_wise_feed_forward.2} parent=5 // pred_fallthru
        _
      %p289 = scmp.le.s32.totalorder 1, %s17
      %p290 = scmp.lt.s32.totalorder %s17, 9
      %p291 = pnand %p289, %p290
      %p292 = pneg %p291
      // Predicated region
      $region37: #{position_wise_feed_forward.2} parent=5 // pred_check
        _
      $region38: #{position_wise_feed_forward.2} parent=5 // pred_check_branch
        %294 = sbr.rel (%p291) target = $region40
      $region39: #{position_wise_feed_forward.2} parent=5 // pred_region
        %s295 = ssub.s32 %s17, 1
        %s296 = sand.u32 %s42, 1
        %s297 = scalar_lea.sflag [#allocation4], %s296
        %s298 = sand.u32 %s42, 1
        %s299 = smul.addr %s298, 64
        %s300 = scalar_lea.vmem [#allocation3], %s299
        // Predicated region
        $region41: #{position_wise_feed_forward.2} parent=39 // pred_check
          %p301 = pneg %p55
        $region42: #{position_wise_feed_forward.2} parent=39 // pred_check_branch
          %303 = sbr.rel (%p301) target = $region44
        $region43: #{position_wise_feed_forward.2} parent=39 // pred_region
          %304 = dma.done %s297, 1024
        $region44: #{position_wise_feed_forward.2} parent=39 // pred_fallthru
          _
        // Predicated region
        $region45: #{position_wise_feed_forward.2} parent=39 // pred_check
          %p305 = pneg %p81
        $region46: #{position_wise_feed_forward.2} parent=39 // pred_check_branch
          %307 = sbr.rel (%p305) target = $region48
        $region47: #{position_wise_feed_forward.2} parent=39 // pred_region
          %308 = dma.done [#allocation6], 4096
        $region48: #{position_wise_feed_forward.2} parent=39 // pred_fallthru
          _
        // Predicated region
        $region49: #{position_wise_feed_forward.2} parent=39 // pred_check
          %p309 = pneg %p133
        $region50: #{position_wise_feed_forward.2} parent=39 // pred_check_branch
          %311 = sbr.rel (%p309) target = $region52
        $region51: #{position_wise_feed_forward.2} parent=39 // pred_region
          %312 = dma.done [#allocation6], 4096
        $region52: #{position_wise_feed_forward.2} parent=39 // pred_fallthru
          _
        %s313 = sand.u32 %s42, 1
        %s314 = scalar_lea.sflag [#allocation4], %s313
        %s315 = sand.u32 %s42, 1
        %s316 = smul.addr %s315, 64
        %s317 = scalar_lea.vmem [#allocation3], %s316
        %p318 = pneg %p55
        %p319 = pneg %p52
        %p320 = pneg %p81
        %p321 = pneg %p78
        %s322 = smul.u32 2, %s27
        %p323 = scmp.lt.s32.totalorder %s322, 1
        %s324 = scalar_select %p323, %s322, 1
        %s325 = scalar_lea.vmem %s2, %s324
        %p326 = pneg %p107
        %p327 = pneg %p104
        %p328 = pneg %p133
        %p329 = pneg %p130
        %p330 = pneg %p154
        %p331 = pneg %p151
        %p332 = pneg %p180
        %p333 = pneg %p177
        %s334 = smul.u32 8, %s26
        %p335 = scmp.lt.s32.totalorder %s334, 63
        %s336 = scalar_select %p335, %s334, 63
        %s337 = smul.addr %s336, 8
        %s338 = scalar_lea.vmem %s5, %s337
        %p339 = pneg %p206
        %p340 = pneg %p203
        %p341 = scmp.lt.s32.totalorder %s26, 7
        %s342 = scalar_select %p341, %s26, 7
        %s343 = smul.addr %s342, 8
        %s344 = scalar_lea.vmem %s6, %s343
        %s345 = smul.u32 8, %s26
        %s346 = smul.u32 2, %s27
        %s347 = smul.u32 2, %s27
        %p348 = scmp.lt.s32.totalorder %s347, 1
        %s349 = scalar_select %p348, %s347, 1
        %s350 = scalar_lea.vmem %s2, %s349
        %s351 = smul.u32 2, %s27
        %s352 = smul.u32 32, %s27
        %s353 = smul.u32 8, %s26
        %p354 = scmp.lt.s32.totalorder %s353, 63
        %s355 = scalar_select %p354, %s353, 63
        %s356 = smul.addr %s355, 8
        %s357 = scalar_lea.vmem %s5, %s356
        %s358 = smul.u32 8, %s26
        %p359 = scmp.lt.s32.totalorder %s26, 7
        %s360 = scalar_select %p359, %s26, 7
        %s361 = smul.addr %s360, 8
        %s362 = scalar_lea.vmem %s6, %s361
        %v363 = vld [vmem:[%s300] sm:$0xff]
        %v364 = vld [vmem:[%s300 + $0x8] sm:$0xff]
        %v365 = vld [vmem:[%s300 + $0x10] sm:$0xff]
        %v366 = vld [vmem:[%s300 + $0x18] sm:$0xff]
        %v367 = vld [vmem:[%s300 + $0x20] sm:$0xff]
        %v368 = vld [vmem:[%s300 + $0x28] sm:$0xff]
        %v369 = vld [vmem:[%s300 + $0x30] sm:$0xff]
        %v370 = vld [vmem:[%s300 + $0x38] sm:$0xff]
        %v371 = vld [vmem:[#allocation5] sm:$0xff]
        %v372 = vld [vmem:[#allocation5 + $0x8] sm:$0xff]
        %v373 = vld [vmem:[#allocation5 + $0x10] sm:$0xff]
        %v374 = vld [vmem:[#allocation5 + $0x18] sm:$0xff]
        %v375 = vld [vmem:[#allocation5 + $0x20] sm:$0xff]
        %v376 = vld [vmem:[#allocation5 + $0x28] sm:$0xff]
        %v377 = vld [vmem:[#allocation5 + $0x30] sm:$0xff]
        %v378 = vld [vmem:[#allocation5 + $0x38] sm:$0xff]
        %v379 = vld [vmem:[#allocation5 + $0x40] sm:$0xff]
        %v380 = vld [vmem:[#allocation5 + $0x48] sm:$0xff]
        %v381 = vld [vmem:[#allocation5 + $0x50] sm:$0xff]
        %v382 = vld [vmem:[#allocation5 + $0x58] sm:$0xff]
        %v383 = vld [vmem:[#allocation5 + $0x60] sm:$0xff]
        %v384 = vld [vmem:[#allocation5 + $0x68] sm:$0xff]
        %v385 = vld [vmem:[#allocation5 + $0x70] sm:$0xff]
        %v386 = vld [vmem:[#allocation5 + $0x78] sm:$0xff]
        %v387 = vld [vmem:[#allocation5 + $0x80] sm:$0xff]
        %v388 = vld [vmem:[#allocation5 + $0x88] sm:$0xff]
        %v389 = vld [vmem:[#allocation5 + $0x90] sm:$0xff]
        %v390 = vld [vmem:[#allocation5 + $0x98] sm:$0xff]
        %v391 = vld [vmem:[#allocation5 + $0xa0] sm:$0xff]
        %v392 = vld [vmem:[#allocation5 + $0xa8] sm:$0xff]
        %v393 = vld [vmem:[#allocation5 + $0xb0] sm:$0xff]
        %v394 = vld [vmem:[#allocation5 + $0xb8] sm:$0xff]
        %v395 = vld [vmem:[#allocation5 + $0xc0] sm:$0xff]
        %v396 = vld [vmem:[#allocation5 + $0xc8] sm:$0xff]
        %v397 = vld [vmem:[#allocation5 + $0xd0] sm:$0xff]
        %v398 = vld [vmem:[#allocation5 + $0xd8] sm:$0xff]
        %v399 = vld [vmem:[#allocation5 + $0xe0] sm:$0xff]
        %v400 = vld [vmem:[#allocation5 + $0xe8] sm:$0xff]
        %v401 = vld [vmem:[#allocation5 + $0xf0] sm:$0xff]
        %v402 = vld [vmem:[#allocation5 + $0xf8] sm:$0xff]
        %v403 = vld [vmem:[%s350] sm:$0x3]
        %v405 = vlaneseq
        %v406 = vshrl.u32 %v405, 7
        %v407 = vsub.s32 0, %v406
        %v408 = vrot.slane %v403, %v407
        %v409 = vlaneseq
        %v410 = vshrl.u32 %v409, 7
        %v411 = vsub.s32 1, %v410
        %v412 = vrot.slane %v403, %v411
        %415 = vmatprep.subr.mxu0 %v402
        %416 = vmatpush1.msra.mxu0 %v401
        %417 = vmatprep.subr.mxu0 %v400
        %418 = vmatpush1.msra.mxu0 %v399
        %419 = vmatprep.subr.mxu0 %v398
        %420 = vmatpush1.msra.mxu0 %v397
        %421 = vmatprep.subr.mxu0 %v396
        %422 = vmatpush1.msra.mxu0 %v395
        %423 = vmatprep.subr.mxu0 %v394
        %424 = vmatpush1.msra.mxu0 %v393
        %425 = vmatprep.subr.mxu0 %v392
        %426 = vmatpush1.msra.mxu0 %v391
        %427 = vmatprep.subr.mxu0 %v390
        %428 = vmatpush1.msra.mxu0 %v389
        %429 = vmatprep.subr.mxu0 %v388
        %430 = vmatpush1.msra.mxu0 %v387
        %431 = vmatprep.subr.mxu0 %v386
        %432 = vmatpush1.msra.mxu0 %v385
        %433 = vmatprep.subr.mxu0 %v384
        %434 = vmatpush1.msra.mxu0 %v383
        %435 = vmatprep.subr.mxu0 %v382
        %436 = vmatpush1.msra.mxu0 %v381
        %437 = vmatprep.subr.mxu0 %v380
        %438 = vmatpush1.msra.mxu0 %v379
        %439 = vmatprep.subr.mxu0 %v378
        %440 = vmatpush1.msra.mxu0 %v377
        %441 = vmatprep.subr.mxu0 %v376
        %442 = vmatpush1.msra.mxu0 %v375
        %443 = vmatprep.subr.mxu0 %v374
        %444 = vmatpush1.msra.mxu0 %v373
        %445 = vmatprep.subr.mxu0 %v372
        %446 = vmatpush1.msra.mxu0 %v371
        %447 = vmatprep.subr.mxu0 0.0
        %448 = vmatpush2.msra.mxu0 0.0
        %449 = vmatprep.subr.mxu0 0.0
        %450 = vmatpush2.msra.mxu0 0.0
        %451 = vmatprep.subr.mxu0 0.0
        %452 = vmatpush2.msra.mxu0 0.0
        %453 = vmatprep.subr.mxu0 0.0
        %454 = vmatpush2.msra.mxu0 0.0
        %455 = vmatprep.subr.mxu0 0.0
        %456 = vmatpush2.msra.mxu0 0.0
        %457 = vmatprep.subr.mxu0 0.0
        %458 = vmatpush2.msra.mxu0 0.0
        %459 = vmatprep.subr.mxu0 0.0
        %460 = vmatpush2.msra.mxu0 0.0
        %461 = vmatprep.subr.mxu0 0.0
        %462 = vmatpush2.msra.mxu0 0.0
        %463 = vmatprep.subr.mxu0 0.0
        %464 = vmatpush2.msra.mxu0 0.0
        %465 = vmatprep.subr.mxu0 0.0
        %466 = vmatpush2.msra.mxu0 0.0
        %467 = vmatprep.subr.mxu0 0.0
        %468 = vmatpush2.msra.mxu0 0.0
        %469 = vmatprep.subr.mxu0 0.0
        %470 = vmatpush2.msra.mxu0 0.0
        %471 = vmatprep.subr.mxu0 0.0
        %472 = vmatpush2.msra.mxu0 0.0
        %473 = vmatprep.subr.mxu0 0.0
        %474 = vmatpush2.msra.mxu0 0.0
        %475 = vmatprep.subr.mxu0 0.0
        %476 = vmatpush2.msra.mxu0 0.0
        %477 = vmatprep.subr.mxu0 0.0
        %478 = vmatpush2.msra.mxu0 0.0
        %479 = vmatprep.mubr.f32.mxu0 0.0
        %480 = vmatmul.mubr.f32.gmra.mxu0 %v363
        %v481 = vpop.f32.mrf.mxu0
        %v482 = vadd.f32 %v408, %v481
        %v483 = vpop.f32.mrf.mxu0
        %v484 = vadd.f32 %v412, %v483
        %485 = vmatprep.mubr.f32.mxu0 0.0
        %486 = vmatmul.mubr.f32.gmra.mxu0 %v364
        %v487 = vpop.f32.mrf.mxu0
        %v488 = vadd.f32 %v408, %v487
        %v489 = vpop.f32.mrf.mxu0
        %v490 = vadd.f32 %v412, %v489
        %491 = vmatprep.mubr.f32.mxu0 0.0
        %492 = vmatmul.mubr.f32.gmra.mxu0 %v365
        %v493 = vpop.f32.mrf.mxu0
        %v494 = vadd.f32 %v408, %v493
        %v495 = vpop.f32.mrf.mxu0
        %v496 = vadd.f32 %v412, %v495
        %497 = vmatprep.mubr.f32.mxu0 0.0
        %498 = vmatmul.mubr.f32.gmra.mxu0 %v366
        %v499 = vpop.f32.mrf.mxu0
        %v500 = vadd.f32 %v408, %v499
        %v501 = vpop.f32.mrf.mxu0
        %v502 = vadd.f32 %v412, %v501
        %503 = vmatprep.mubr.f32.mxu0 0.0
        %504 = vmatmul.mubr.f32.gmra.mxu0 %v367
        %v505 = vpop.f32.mrf.mxu0
        %v506 = vadd.f32 %v408, %v505
        %v507 = vpop.f32.mrf.mxu0
        %v508 = vadd.f32 %v412, %v507
        %509 = vmatprep.mubr.f32.mxu0 0.0
        %510 = vmatmul.mubr.f32.gmra.mxu0 %v368
        %v511 = vpop.f32.mrf.mxu0
        %v512 = vadd.f32 %v408, %v511
        %v513 = vpop.f32.mrf.mxu0
        %v514 = vadd.f32 %v412, %v513
        %515 = vmatprep.mubr.f32.mxu0 0.0
        %516 = vmatmul.mubr.f32.gmra.mxu0 %v369
        %v517 = vpop.f32.mrf.mxu0
        %v518 = vadd.f32 %v408, %v517
        %v519 = vpop.f32.mrf.mxu0
        %v520 = vadd.f32 %v412, %v519
        %521 = vmatprep.mubr.f32.mxu0 0.0
        %522 = vmatmul.mubr.f32.gmra.mxu0 %v370
        %v523 = vpop.f32.mrf.mxu0
        %v524 = vadd.f32 %v408, %v523
        %v525 = vpop.f32.mrf.mxu0
        %v526 = vadd.f32 %v412, %v525
        %527 = vdwg.mxu0
        %v528 = vmax.f32 %v482, 0.0
        %v529 = vmax.f32 %v484, 0.0
        %v530 = vmax.f32 %v488, 0.0
        %v531 = vmax.f32 %v490, 0.0
        %v532 = vmax.f32 %v494, 0.0
        %v533 = vmax.f32 %v496, 0.0
        %v534 = vmax.f32 %v500, 0.0
        %v535 = vmax.f32 %v502, 0.0
        %v536 = vmax.f32 %v506, 0.0
        %v537 = vmax.f32 %v508, 0.0
        %v538 = vmax.f32 %v512, 0.0
        %v539 = vmax.f32 %v514, 0.0
        %v540 = vmax.f32 %v518, 0.0
        %v541 = vmax.f32 %v520, 0.0
        %v542 = vmax.f32 %v524, 0.0
        %v543 = vmax.f32 %v526, 0.0
        %v544 = vld [vmem:[#allocation7] sm:$0xff]
        %v545 = vld [vmem:[#allocation7 + $0x8] sm:$0xff]
        %v546 = vld [vmem:[#allocation7 + $0x10] sm:$0xff]
        %v547 = vld [vmem:[#allocation7 + $0x18] sm:$0xff]
        %v548 = vld [vmem:[#allocation7 + $0x20] sm:$0xff]
        %v549 = vld [vmem:[#allocation7 + $0x28] sm:$0xff]
        %v550 = vld [vmem:[#allocation7 + $0x30] sm:$0xff]
        %v551 = vld [vmem:[#allocation7 + $0x38] sm:$0xff]
        %v552 = vld [vmem:[#allocation7 + $0x40] sm:$0xff]
        %v553 = vld [vmem:[#allocation7 + $0x48] sm:$0xff]
        %v554 = vld [vmem:[#allocation7 + $0x50] sm:$0xff]
        %v555 = vld [vmem:[#allocation7 + $0x58] sm:$0xff]
        %v556 = vld [vmem:[#allocation7 + $0x60] sm:$0xff]
        %v557 = vld [vmem:[#allocation7 + $0x68] sm:$0xff]
        %v558 = vld [vmem:[#allocation7 + $0x70] sm:$0xff]
        %v559 = vld [vmem:[#allocation7 + $0x78] sm:$0xff]
        %v560 = vld [vmem:[#allocation7 + $0x80] sm:$0xff]
        %v561 = vld [vmem:[#allocation7 + $0x88] sm:$0xff]
        %v562 = vld [vmem:[#allocation7 + $0x90] sm:$0xff]
        %v563 = vld [vmem:[#allocation7 + $0x98] sm:$0xff]
        %v564 = vld [vmem:[#allocation7 + $0xa0] sm:$0xff]
        %v565 = vld [vmem:[#allocation7 + $0xa8] sm:$0xff]
        %v566 = vld [vmem:[#allocation7 + $0xb0] sm:$0xff]
        %v567 = vld [vmem:[#allocation7 + $0xb8] sm:$0xff]
        %v568 = vld [vmem:[#allocation7 + $0xc0] sm:$0xff]
        %v569 = vld [vmem:[#allocation7 + $0xc8] sm:$0xff]
        %v570 = vld [vmem:[#allocation7 + $0xd0] sm:$0xff]
        %v571 = vld [vmem:[#allocation7 + $0xd8] sm:$0xff]
        %v572 = vld [vmem:[#allocation7 + $0xe0] sm:$0xff]
        %v573 = vld [vmem:[#allocation7 + $0xe8] sm:$0xff]
        %v574 = vld [vmem:[#allocation7 + $0xf0] sm:$0xff]
        %v575 = vld [vmem:[#allocation7 + $0xf8] sm:$0xff]
        %576 = vmatprep.subr.mxu0 0.0
        %577 = vmatpush1.msra.mxu0 %v559
        %578 = vmatprep.subr.mxu0 0.0
        %579 = vmatpush1.msra.mxu0 %v558
        %580 = vmatprep.subr.mxu0 0.0
        %581 = vmatpush1.msra.mxu0 %v557
        %582 = vmatprep.subr.mxu0 0.0
        %583 = vmatpush1.msra.mxu0 %v556
        %584 = vmatprep.subr.mxu0 0.0
        %585 = vmatpush1.msra.mxu0 %v555
        %586 = vmatprep.subr.mxu0 0.0
        %587 = vmatpush1.msra.mxu0 %v554
        %588 = vmatprep.subr.mxu0 0.0
        %589 = vmatpush1.msra.mxu0 %v553
        %590 = vmatprep.subr.mxu0 0.0
        %591 = vmatpush1.msra.mxu0 %v552
        %592 = vmatprep.subr.mxu0 0.0
        %593 = vmatpush1.msra.mxu0 %v551
        %594 = vmatprep.subr.mxu0 0.0
        %595 = vmatpush1.msra.mxu0 %v550
        %596 = vmatprep.subr.mxu0 0.0
        %597 = vmatpush1.msra.mxu0 %v549
        %598 = vmatprep.subr.mxu0 0.0
        %599 = vmatpush1.msra.mxu0 %v548
        %600 = vmatprep.subr.mxu0 0.0
        %601 = vmatpush1.msra.mxu0 %v547
        %602 = vmatprep.subr.mxu0 0.0
        %603 = vmatpush1.msra.mxu0 %v546
        %604 = vmatprep.subr.mxu0 0.0
        %605 = vmatpush1.msra.mxu0 %v545
        %606 = vmatprep.subr.mxu0 0.0
        %607 = vmatpush1.msra.mxu0 %v544
        %608 = vmatprep.subr.mxu0 0.0
        %609 = vmatpush2.msra.mxu0 %v575
        %610 = vmatprep.subr.mxu0 0.0
        %611 = vmatpush2.msra.mxu0 %v574
        %612 = vmatprep.subr.mxu0 0.0
        %613 = vmatpush2.msra.mxu0 %v573
        %614 = vmatprep.subr.mxu0 0.0
        %615 = vmatpush2.msra.mxu0 %v572
        %616 = vmatprep.subr.mxu0 0.0
        %617 = vmatpush2.msra.mxu0 %v571
        %618 = vmatprep.subr.mxu0 0.0
        %619 = vmatpush2.msra.mxu0 %v570
        %620 = vmatprep.subr.mxu0 0.0
        %621 = vmatpush2.msra.mxu0 %v569
        %622 = vmatprep.subr.mxu0 0.0
        %623 = vmatpush2.msra.mxu0 %v568
        %624 = vmatprep.subr.mxu0 0.0
        %625 = vmatpush2.msra.mxu0 %v567
        %626 = vmatprep.subr.mxu0 0.0
        %627 = vmatpush2.msra.mxu0 %v566
        %628 = vmatprep.subr.mxu0 0.0
        %629 = vmatpush2.msra.mxu0 %v565
        %630 = vmatprep.subr.mxu0 0.0
        %631 = vmatpush2.msra.mxu0 %v564
        %632 = vmatprep.subr.mxu0 0.0
        %633 = vmatpush2.msra.mxu0 %v563
        %634 = vmatprep.subr.mxu0 0.0
        %635 = vmatpush2.msra.mxu0 %v562
        %636 = vmatprep.subr.mxu0 0.0
        %637 = vmatpush2.msra.mxu0 %v561
        %638 = vmatprep.subr.mxu0 0.0
        %639 = vmatpush2.msra.mxu0 %v560
        %640 = vmatprep.mubr.f32.mxu0 %v529
        %641 = vmatmul.mubr.f32.gmra.mxu0 %v528
        %v642 = vpop.f32.mrf.mxu0
        %v643 = vadd.f32 0.0, %v642
        %v644 = vpop.f32.mrf.mxu0
        %645 = vmatprep.mubr.f32.mxu0 %v531
        %646 = vmatmul.mubr.f32.gmra.mxu0 %v530
        %v647 = vpop.f32.mrf.mxu0
        %v648 = vadd.f32 0.0, %v647
        %v649 = vpop.f32.mrf.mxu0
        %650 = vmatprep.mubr.f32.mxu0 %v533
        %651 = vmatmul.mubr.f32.gmra.mxu0 %v532
        %v652 = vpop.f32.mrf.mxu0
        %v653 = vadd.f32 0.0, %v652
        %v654 = vpop.f32.mrf.mxu0
        %655 = vmatprep.mubr.f32.mxu0 %v535
        %656 = vmatmul.mubr.f32.gmra.mxu0 %v534
        %v657 = vpop.f32.mrf.mxu0
        %v658 = vadd.f32 0.0, %v657
        %v659 = vpop.f32.mrf.mxu0
        %660 = vmatprep.mubr.f32.mxu0 %v537
        %661 = vmatmul.mubr.f32.gmra.mxu0 %v536
        %v662 = vpop.f32.mrf.mxu0
        %v663 = vadd.f32 0.0, %v662
        %v664 = vpop.f32.mrf.mxu0
        %665 = vmatprep.mubr.f32.mxu0 %v539
        %666 = vmatmul.mubr.f32.gmra.mxu0 %v538
        %v667 = vpop.f32.mrf.mxu0
        %v668 = vadd.f32 0.0, %v667
        %v669 = vpop.f32.mrf.mxu0
        %670 = vmatprep.mubr.f32.mxu0 %v541
        %671 = vmatmul.mubr.f32.gmra.mxu0 %v540
        %v672 = vpop.f32.mrf.mxu0
        %v673 = vadd.f32 0.0, %v672
        %v674 = vpop.f32.mrf.mxu0
        %675 = vmatprep.mubr.f32.mxu0 %v543
        %676 = vmatmul.mubr.f32.gmra.mxu0 %v542
        %v677 = vpop.f32.mrf.mxu0
        %v678 = vadd.f32 0.0, %v677
        %v679 = vpop.f32.mrf.mxu0
        %680 = vdwg.mxu0
        %p681 = scmp.eq.s32.totalorder %s27, 0
        // Predicated region
        $region53: #{position_wise_feed_forward.2} parent=39 // pred_check
          %p682 = pneg %p681
        $region54: #{position_wise_feed_forward.2} parent=39 // pred_check_branch
          %684 = sbr.rel (%p682) target = $region56
        $region55: #{position_wise_feed_forward.2} parent=39 // pred_region
          %685 = vst [vmem:[#allocation2] sm:$0xff] %v643
          %686 = vst [vmem:[#allocation2 + $0x8] sm:$0xff] %v648
          %687 = vst [vmem:[#allocation2 + $0x10] sm:$0xff] %v653
          %688 = vst [vmem:[#allocation2 + $0x18] sm:$0xff] %v658
          %689 = vst [vmem:[#allocation2 + $0x20] sm:$0xff] %v663
          %690 = vst [vmem:[#allocation2 + $0x28] sm:$0xff] %v668
          %691 = vst [vmem:[#allocation2 + $0x30] sm:$0xff] %v673
          %692 = vst [vmem:[#allocation2 + $0x38] sm:$0xff] %v678
        $region56: #{position_wise_feed_forward.2} parent=39 // pred_fallthru
          _
        %p693 = scmp.gt.s32.totalorder %s27, 0
        // Predicated region
        $region57: #{position_wise_feed_forward.2} parent=39 // pred_check
          %p694 = pneg %p693
        $region58: #{position_wise_feed_forward.2} parent=39 // pred_check_branch
          %696 = sbr.rel (%p694) target = $region60
        $region59: #{position_wise_feed_forward.2} parent=39 // pred_region
          %v697 = vld [vmem:[#allocation2] sm:$0xff]
          %v698 = vld [vmem:[#allocation2 + $0x8] sm:$0xff]
          %v699 = vld [vmem:[#allocation2 + $0x10] sm:$0xff]
          %v700 = vld [vmem:[#allocation2 + $0x18] sm:$0xff]
          %v701 = vld [vmem:[#allocation2 + $0x20] sm:$0xff]
          %v702 = vld [vmem:[#allocation2 + $0x28] sm:$0xff]
          %v703 = vld [vmem:[#allocation2 + $0x30] sm:$0xff]
          %v704 = vld [vmem:[#allocation2 + $0x38] sm:$0xff]
          %v705 = vadd.f32 %v697, %v643
          %v706 = vadd.f32 %v698, %v648
          %v707 = vadd.f32 %v699, %v653
          %v708 = vadd.f32 %v700, %v658
          %v709 = vadd.f32 %v701, %v663
          %v710 = vadd.f32 %v702, %v668
          %v711 = vadd.f32 %v703, %v673
          %v712 = vadd.f32 %v704, %v678
          %713 = vst [vmem:[#allocation2] sm:$0xff] %v705
          %714 = vst [vmem:[#allocation2 + $0x8] sm:$0xff] %v706
          %715 = vst [vmem:[#allocation2 + $0x10] sm:$0xff] %v707
          %716 = vst [vmem:[#allocation2 + $0x18] sm:$0xff] %v708
          %717 = vst [vmem:[#allocation2 + $0x20] sm:$0xff] %v709
          %718 = vst [vmem:[#allocation2 + $0x28] sm:$0xff] %v710
          %719 = vst [vmem:[#allocation2 + $0x30] sm:$0xff] %v711
          %720 = vst [vmem:[#allocation2 + $0x38] sm:$0xff] %v712
        $region60: #{position_wise_feed_forward.2} parent=39 // pred_fallthru
          _
        // Predicated region
        $region61: #{position_wise_feed_forward.2} parent=39 // pred_check
          %p721 = pneg %p681
        $region62: #{position_wise_feed_forward.2} parent=39 // pred_check_branch
          %723 = sbr.rel (%p721) target = $region64
        $region63: #{position_wise_feed_forward.2} parent=39 // pred_region
          %v724 = vld [vmem:[#allocation2] sm:$0xff]
          %v725 = vld [vmem:[#allocation2 + $0x8] sm:$0xff]
          %v726 = vld [vmem:[#allocation2 + $0x10] sm:$0xff]
          %v727 = vld [vmem:[#allocation2 + $0x18] sm:$0xff]
          %v728 = vld [vmem:[#allocation2 + $0x20] sm:$0xff]
          %v729 = vld [vmem:[#allocation2 + $0x28] sm:$0xff]
          %v730 = vld [vmem:[#allocation2 + $0x30] sm:$0xff]
          %v731 = vld [vmem:[#allocation2 + $0x38] sm:$0xff]
          %v732 = vld [vmem:[%s4] sm:$0x1]
          %v734 = vlaneseq
          %v735 = vshrl.u32 %v734, 7
          %v736 = vsub.s32 0, %v735
          %v737 = vrot.slane %v732, %v736
          %v739 = vadd.f32 %v724, %v737
          %v740 = vadd.f32 %v725, %v737
          %v741 = vadd.f32 %v726, %v737
          %v742 = vadd.f32 %v727, %v737
          %v743 = vadd.f32 %v728, %v737
          %v744 = vadd.f32 %v729, %v737
          %v745 = vadd.f32 %v730, %v737
          %v746 = vadd.f32 %v731, %v737
          %v747 = vadd.f32 %v739, %v363
          %v748 = vadd.f32 %v740, %v364
          %v749 = vadd.f32 %v741, %v365
          %v750 = vadd.f32 %v742, %v366
          %v751 = vadd.f32 %v743, %v367
          %v752 = vadd.f32 %v744, %v368
          %v753 = vadd.f32 %v745, %v369
          %v754 = vadd.f32 %v746, %v370
          %755 = vst [vmem:[%s357] sm:$0xff] %v747
          %756 = vst [vmem:[%s357 + $0x8] sm:$0xff] %v748
          %757 = vst [vmem:[%s357 + $0x10] sm:$0xff] %v749
          %758 = vst [vmem:[%s357 + $0x18] sm:$0xff] %v750
          %759 = vst [vmem:[%s357 + $0x20] sm:$0xff] %v751
          %760 = vst [vmem:[%s357 + $0x28] sm:$0xff] %v752
          %761 = vst [vmem:[%s357 + $0x30] sm:$0xff] %v753
          %762 = vst [vmem:[%s357 + $0x38] sm:$0xff] %v754
          %v763 = vadd.f32 %v747, %v748
          %v764 = vadd.f32 %v763, %v749
          %v765 = vadd.f32 %v764, %v750
          %v766 = vadd.f32 %v765, %v751
          %v767 = vadd.f32 %v766, %v752
          %v768 = vadd.f32 %v767, %v753
          %v769 = vadd.f32 %v768, %v754
          %v770 = vrot.slane %v769, 4
          %v771 = vadd.f32 %v769, %v770
          %v772 = vrot.slane %v771, 2
          %v773 = vadd.f32 %v771, %v772
          %v774 = vrot.slane %v773, 1
          %v775 = vadd.f32 %v773, %v774
          %v776 = vmul.f32 %v747, %v747
          %v777 = vmul.f32 %v748, %v748
          %v778 = vmul.f32 %v749, %v749
          %v779 = vmul.f32 %v750, %v750
          %v780 = vmul.f32 %v751, %v751
          %v781 = vmul.f32 %v752, %v752
          %v782 = vmul.f32 %v753, %v753
          %v783 = vmul.f32 %v754, %v754
          %v784 = vadd.f32 %v776, %v777
          %v785 = vadd.f32 %v784, %v778
          %v786 = vadd.f32 %v785, %v779
          %v787 = vadd.f32 %v786, %v780
          %v788 = vadd.f32 %v787, %v781
          %v789 = vadd.f32 %v788, %v782
          %v790 = vadd.f32 %v789, %v783
          %v791 = vrot.slane %v790, 4
          %v792 = vadd.f32 %v790, %v791
          %v793 = vrot.slane %v792, 2
          %v794 = vadd.f32 %v792, %v793
          %v795 = vrot.slane %v794, 1
          %v796 = vadd.f32 %v794, %v795
          %vm797 = vcmask 1040384
          %v798 = vsel %vm797, %v775, %v796
          %vm799 = vcmask 1041408
          %v800 = vsel %vm799, %v798, 0.0
          %801 = vst [vmem:[%s362] sm:$0xff] %v800
        $region64: #{position_wise_feed_forward.2} parent=39 // pred_fallthru
          _
        %s802 = smul.u32 8, %s26
        %p803 = scmp.lt.s32.totalorder %s802, 63
        %s804 = scalar_select %p803, %s802, 63
        %s805 = smul.addr %s804, 8
        %s806 = scalar_lea.vmem %s5, %s805
        %p807 = scmp.lt.s32.totalorder %s26, 7
        %s808 = scalar_select %p807, %s26, 7
        %s809 = smul.addr %s808, 8
        %s810 = scalar_lea.vmem %s6, %s809
        // Predicated region
        $region65: #{position_wise_feed_forward.2} parent=39 // pred_check
          %p811 = pneg %p177
        $region66: #{position_wise_feed_forward.2} parent=39 // pred_check_branch
          %813 = sbr.rel (%p811) target = $region68
        $region67: #{position_wise_feed_forward.2} parent=39 // pred_region
          %s814 = smul.u32 8, %s26
        $region68: #{position_wise_feed_forward.2} parent=39 // pred_fallthru
          _
        // Predicated region
        $region69: #{position_wise_feed_forward.2} parent=39 // pred_check
          %p815 = pneg %p203
        $region70: #{position_wise_feed_forward.2} parent=39 // pred_check_branch
          %817 = sbr.rel (%p815) target = $region72
        $region71: #{position_wise_feed_forward.2} parent=39 // pred_region
          _
        $region72: #{position_wise_feed_forward.2} parent=39 // pred_fallthru
          _
      $region40: #{position_wise_feed_forward.2} parent=5 // pred_fallthru
        _
      %p818 = scmp.le.s32.totalorder 2, %s17
      // Predicated region
      $region73: #{position_wise_feed_forward.2} parent=5 // pred_check
        %p819 = pneg %p818
      $region74: #{position_wise_feed_forward.2} parent=5 // pred_check_branch
        %821 = sbr.rel (%p819) target = $region76
      $region75: #{position_wise_feed_forward.2} parent=5 // pred_region
        %s822 = ssub.s32 %s17, 2
        // Predicated region
        $region77: #{position_wise_feed_forward.2} parent=75 // pred_check
          %p823 = pneg %p183
        $region78: #{position_wise_feed_forward.2} parent=75 // pred_check_branch
          %825 = sbr.rel (%p823) target = $region80
        $region79: #{position_wise_feed_forward.2} parent=75 // pred_region
          %s826 = smul.u32 8, %s28
          %p827 = scmp.lt.s32.totalorder %s826, 63
          %s828 = scalar_select %p827, %s826, 63
          %s829 = smul.addr %s828, 8
          %s830 = scalar_lea.vmem %s5, %s829
        $region80: #{position_wise_feed_forward.2} parent=75 // pred_fallthru
          _
        // Predicated region
        $region81: #{position_wise_feed_forward.2} parent=75 // pred_check
          %p831 = pneg %p209
        $region82: #{position_wise_feed_forward.2} parent=75 // pred_check_branch
          %833 = sbr.rel (%p831) target = $region84
        $region83: #{position_wise_feed_forward.2} parent=75 // pred_region
          %p834 = scmp.lt.s32.totalorder %s28, 7
          %s835 = scalar_select %p834, %s28, 7
          %s836 = smul.addr %s835, 8
          %s837 = scalar_lea.vmem %s6, %s836
        $region84: #{position_wise_feed_forward.2} parent=75 // pred_fallthru
          _
      $region76: #{position_wise_feed_forward.2} parent=5 // pred_fallthru
        _
    $region6: #{position_wise_feed_forward.2} parent=1 // loop_footer
      %s21 = sadd.s32 1, %s17
    $region7: #{position_wise_feed_forward.2} parent=1 // loop_footer_branch
      %16 = sbr.rel target = $region3
    $region8: #{position_wise_feed_forward.2} parent=1 // loop_exit
      _
    %838 = vsyncpa [#allocation4], 1
    %s839 = scalar_lea.sflag [#allocation4], 1
    %840 = vsyncpa %s839, 1
    %841 = vsyncpa [#allocation6], 1

</llo_original>
